<compile_context>
chip_gen: v7x
topology: tpu7x:2x2x1
jax: 0.10.0
libtpu: 0.0.40
codegen_flags: <defaults>
</compile_context>

<pallas_src>
import collections
import functools

import jax
import jax.numpy as jnp
from jax import lax
from jax.experimental import pallas as pl
from jax.experimental.pallas import tpu as pltpu


Layout = collections.namedtuple(
    "Layout",
    ["off_det", "off_o", "off_p", "off_c", "off_t",
     "pack_w", "num_class", "kernel_num", "single_buf"])


def _round_up(x, m):
    return (x + m - 1) // m * m


def _cdiv(a, b):
    return -(-a // b)


@functools.lru_cache(maxsize=1)
def _single_buffer_supported():
    """Probe whether pipeline_mode=pl.Buffered(1) (single-buffered resident
    weights) is accepted by this jax/libtpu build; fall back gracefully."""
    try:
        spec = pl.BlockSpec((8, 128), lambda i: (0, 0),
                            pipeline_mode=pl.Buffered(1))

        def _probe(x_ref, o_ref):
            o_ref[...] = x_ref[...] + 1.0

        fn = pl.pallas_call(
            _probe,
            out_shape=jax.ShapeDtypeStruct((8, 128), jnp.float32),
            grid=(1,),
            in_specs=[spec],
            out_specs=pl.BlockSpec((8, 128), lambda i: (0, 0)))
        jax.block_until_ready(fn(jnp.zeros((8, 128), jnp.float32)))
        return True
    except Exception:  # noqa: BLE001 - any failure -> default double buffering
        return False


def _layernorm(x, gamma, beta, eps=1e-5):
    # Single-pass layernorm: E[x] and E[x^2] in one sweep, var = E[x^2] - mu^2.
    mu = jnp.mean(x, axis=-1, keepdims=True)
    ms = jnp.mean(x * x, axis=-1, keepdims=True)
    var = ms - mu * mu
    return (x - mu) * lax.rsqrt(var + eps) * gamma + beta


# ----------------------------------------------------------------------------
# Fused kernel: K-tiled encoders -> detect gating -> fusion -> attention -> heads
# ----------------------------------------------------------------------------
def avfdti_kernel(x_ref, y_ref, vecs_ref,
                  wa_ref, wv_ref, wd1_ref, wd2_ref, wd3_ref,
                  wvo_ref, ffw1_ref, ffw2_ref, dnw_ref, wh_ref,
                  xout_ref, packed_ref,
                  ftf_acc, fvis_acc,
                  *, num_class, off_det, off_o, off_p):
    f32 = jnp.float32
    bf16 = jnp.bfloat16
    k = pl.program_id(1)
    nk = pl.num_programs(1)

    def dot(a, w_ref):
        # bf16 x bf16 MXU matmul, f32 accumulation.
        return jnp.dot(a, w_ref[...], preferred_element_type=f32)

    # ---- K-tiled encoder matmuls (AudioNet / VisualNet surrogates) ----------
    @pl.when(k == 0)
    def _():
        ftf_acc[...] = jnp.zeros_like(ftf_acc)
        fvis_acc[...] = jnp.zeros_like(fvis_acc)

    ftf_acc[...] += dot(x_ref[...], wa_ref)
    fvis_acc[...] += dot(y_ref[...], wv_ref)

    # ---- the rest of the network runs once, on the last K step --------------
    @pl.when(k == nk - 1)
    def _():
        fd = ftf_acc.shape[1]
        pack_w = packed_ref.shape[1]
        nc = num_class

        def vec(row, width):
            # One row of the stacked (14, W) bias / layernorm table.
            return vecs_ref[row:row + 1, :width]

        feature_tf = jnp.maximum(ftf_acc[...] + vec(0, fd), 0.0)
        feature_vis = jnp.maximum(fvis_acc[...] + vec(1, fd), 0.0)

        # fc_detect -> fc_detect2 -> fc_detect3 (logits lane-packed into slab)
        h = jnp.maximum(dot(feature_vis.astype(bf16), wd1_ref)
                        + vec(2, wd1_ref.shape[1]), 0.0)
        h = jnp.maximum(dot(h.astype(bf16), wd2_ref)
                        + vec(3, wd2_ref.shape[1]), 0.0)
        det_full = dot(h.astype(bf16), wd3_ref) + vec(4, pack_w)

        # softmax gate over the two detect logits (EUP reciprocal)
        d0 = det_full[:, off_det:off_det + 1]
        d1 = det_full[:, off_det + 1:off_det + 2]
        m = jnp.maximum(d0, d1)
        e0 = jnp.exp(d0 - m)
        e1 = jnp.exp(d1 - m)
        inv = pl.reciprocal(e0 + e1, approx=True)
        fused = (e0 * inv) * feature_tf + (e1 * inv) * feature_vis

        # attentionLayer surrogate: seq_len 1 => softmax == 1; value/out
        # projections folded into wvo; post-norm residual block + FFN.
        attn = dot(fused.astype(bf16), wvo_ref) + vec(5, fd)
        z = _layernorm(fused + attn, vec(6, fd), vec(7, fd))
        ff = jnp.maximum(dot(z.astype(bf16), ffw1_ref)
                         + vec(8, ffw1_ref.shape[1]), 0.0)
        ff = dot(ff.astype(bf16), ffw2_ref) + vec(9, fd)
        f_all = _layernorm(z + ff, vec(10, fd), vec(11, fd))

        # DetectNet surrogate: hidden + lane-packed heads
        hd = jnp.maximum(dot(f_all.astype(bf16), dnw_ref)
                         + vec(12, dnw_ref.shape[1]), 0.0)
        # TODO(synk): xout could be emitted as bf16 to halve writeback BW if
        #             downstream allows; kept f32 for parity with the PyTorch
        #             float outputs.
        xout_ref[...] = hd
        heads = dot(hd.astype(bf16), wh_ref) + vec(13, pack_w)

        # Class softmax: the class-logit columns were duplicated onto the
        # probability lanes at weight-pack time, so no lane shift is needed --
        # just a lane-iota mask, exp, cross-lane reduce and an EUP reciprocal.
        lane = lax.broadcasted_iota(jnp.int32, heads.shape, 1)
        p_mask = (lane >= off_p) & (lane < off_p + nc)
        o_masked = jnp.where(p_mask, heads, -1e30)
        mo = jnp.max(o_masked, axis=-1, keepdims=True)
        eo = jnp.exp(o_masked - mo)                    # ~0 off the prob lanes
        p_vals = eo * pl.reciprocal(jnp.sum(eo, axis=-1, keepdims=True),
                                    approx=True)
        # heads / det_full are zero on each other's populated lanes (zero-padded
        # packed weights, asserted in prepare_params), so addition merges them;
        # the probability lanes are overwritten by the where.
        packed_ref[...] = jnp.where(p_mask, p_vals, heads + det_full)


# ----------------------------------------------------------------------------
# Parameter construction (deterministic, synthetic surrogates)
# ----------------------------------------------------------------------------
def init_params(key, audio_in, visual_in, feature_dim=128, kernel_num=32,
                num_class=6):
    ks = jax.random.split(key, 16)

    def dense(k, i, o, scale=0.02):
        w = scale * jax.random.normal(k, (i, o), jnp.float32)
        return w, jnp.zeros((1, o), jnp.float32)

    p = {}
    p["wa"], p["ba"] = dense(ks[0], audio_in, feature_dim)        # AudioNet
    p["wv"], p["bv"] = dense(ks[1], visual_in, feature_dim)       # VisualNet
    p["wd1"], p["bd1"] = dense(ks[2], feature_dim, 256)           # fc_detect
    p["wd2"], p["bd2"] = dense(ks[3], 256, 128)                   # fc_detect2
    p["wd3"], p["bd3"] = dense(ks[4], 128, 2)                     # fc_detect3
    # attentionLayer (MHA value/out proj + 2 layernorms + FFN)
    p["att_wv"], p["att_bv"] = dense(ks[5], feature_dim, feature_dim)
    p["att_wo"], p["att_bo"] = dense(ks[6], feature_dim, feature_dim)
    p["ln1_g"] = jnp.ones((1, feature_dim), jnp.float32)
    p["ln1_b"] = jnp.zeros((1, feature_dim), jnp.float32)
    p["ff_w1"], p["ff_b1"] = dense(ks[7], feature_dim, 4 * feature_dim)
    p["ff_w2"], p["ff_b2"] = dense(ks[8], 4 * feature_dim, feature_dim)
    p["ln2_g"] = jnp.ones((1, feature_dim), jnp.float32)
    p["ln2_b"] = jnp.zeros((1, feature_dim), jnp.float32)
    # DetectNet heads
    p["dn_w"], p["dn_b"] = dense(ks[9], feature_dim, 256)
    p["dn_wo"], p["dn_bo"] = dense(ks[10], 256, num_class)
    p["dn_wc"], p["dn_bc"] = dense(ks[11], 256, kernel_num)
    p["dn_wt"], p["dn_bt"] = dense(ks[12], 256, 2)
    return p


def prepare_params(p, num_class, kernel_num):
    """Fold attention value/out projections, pack narrow heads onto one
    lane-dense 128-wide slab, stack all bias/LN vectors, cast mats to bf16."""
    feature_dim = p["wa"].shape[1]
    assert feature_dim % 128 == 0, "feature_dim must be a multiple of 128"

    off_det = 0
    off_o = _round_up(off_det + 2, 8)
    off_p = off_o + num_class
    off_c = _round_up(off_p + num_class, 8)
    off_t = off_c + kernel_num
    pack_w = _round_up(off_t + 2, 128)

    # Layout invariants: every logical field owns disjoint lanes.  The kernel
    # merges the slabs by addition / where, so any silent overlap would corrupt
    # outputs -- fail loudly at pack time instead (per correctness review).
    assert off_det + 2 <= off_o
    assert off_o + num_class <= off_p
    assert off_p + num_class <= off_c
    assert off_c + kernel_num <= off_t
    assert off_t + 2 <= pack_w

    bf = jnp.bfloat16
    # Fold MHA value + out projections (no nonlinearity between them).
    w_vo = p["att_wv"] @ p["att_wo"]
    b_vo = p["att_bv"] @ p["att_wo"] + p["att_bo"]

    wd3p = jnp.zeros((p["wd3"].shape[0], pack_w), jnp.float32)
    wd3p = wd3p.at[:, off_det:off_det + 2].set(p["wd3"])
    bd3p = jnp.zeros((1, pack_w), jnp.float32)
    bd3p = bd3p.at[:, off_det:off_det + 2].set(p["bd3"])

    dh = p["dn_wo"].shape[0]                       # DetectNet hidden (256)
    wh = jnp.zeros((dh, pack_w), jnp.float32)
    wh = wh.at[:, off_o:off_o + num_class].set(p["dn_wo"])
    # Duplicate the class-logit columns onto the probability lanes so the
    # in-kernel softmax needs no lane shift (roll / concat) at all.
    wh = wh.at[:, off_p:off_p + num_class].set(p["dn_wo"])
    wh = wh.at[:, off_c:off_c + kernel_num].set(p["dn_wc"])
    wh = wh.at[:, off_t:off_t + 2].set(p["dn_wt"])
    bh = jnp.zeros((1, pack_w), jnp.float32)
    bh = bh.at[:, off_o:off_o + num_class].set(p["dn_bo"])
    bh = bh.at[:, off_p:off_p + num_class].set(p["dn_bo"])
    bh = bh.at[:, off_c:off_c + kernel_num].set(p["dn_bc"])
    bh = bh.at[:, off_t:off_t + 2].set(p["dn_bt"])

    mats = (p["wa"].astype(bf), p["wv"].astype(bf),
            p["wd1"].astype(bf), p["wd2"].astype(bf), wd3p.astype(bf),
            w_vo.astype(bf), p["ff_w1"].astype(bf), p["ff_w2"].astype(bf),
            p["dn_w"].astype(bf), wh.astype(bf))

    # Stack every (1, N) bias / layernorm vector into one f32 table -> one DMA.
    # Row order must match vec(row, ...) usage in the kernel.
    vec_rows = [p["ba"], p["bv"], p["bd1"], p["bd2"], bd3p, b_vo,
                p["ln1_g"], p["ln1_b"], p["ff_b1"], p["ff_b2"],
                p["ln2_g"], p["ln2_b"], p["dn_b"], bh]
    vec_w = max(r.shape[1] for r in vec_rows)
    vecs = jnp.concatenate(
        [jnp.pad(r, ((0, 0), (0, vec_w - r.shape[1]))) for r in vec_rows],
        axis=0)

    layout = Layout(off_det, off_o, off_p, off_c, off_t, pack_w,
                    num_class, kernel_num, _single_buffer_supported())
    return mats, vecs, layout


# ----------------------------------------------------------------------------
# Wrapper: AVFDTI.forward
# ----------------------------------------------------------------------------
@functools.partial(jax.jit, static_argnames=("layout",))
def avfdti_forward(mats, vecs, x, y, *, layout):
    (wa, wv, wd1, wd2, wd3p, wvo, ffw1, ffw2, dnw, wh) = mats
    fd = wa.shape[1]
    dh = dnw.shape[1]
    pack_w = layout.pack_w
    nc = layout.num_class

    b = x.shape[0]
    # bf16 inputs: halves the dominant HBM->VMEM DMA (kernel matmuls are bf16).
    x_flat = x.reshape(b, -1).astype(jnp.bfloat16)
    y_flat = y.reshape(b, -1).astype(jnp.bfloat16)
    ka, kv = x_flat.shape[1], y_flat.shape[1]

    # ---- batch tiling --------------------------------------------------------
    # <=64 rows: one tile.  Larger batches: >=2 grid programs (keeps both v7x
    # TensorCores busy) with tiles up to 512 rows to amortize the ~0.35us/step
    # overhead and fill the 256-wide MXU M dimension on v6e/v7x.
    if b <= 64:
        tb = _round_up(b, 16)
    else:
        tb = min(512, _round_up(_cdiv(b, 2), 16))

    # ---- K tiling for the encoder matmuls ------------------------------------
    # Bounds the wa/wv VMEM blocks so production feature_dim=512 with large
    # flattened visual inputs still fits (v7x has only 64 MiB VMEM per core).
    k_tile = 2048
    nk = max(1, _cdiv(max(ka, kv), k_tile))
    tkx = _round_up(_cdiv(ka, nk), 128)
    tky = _round_up(_cdiv(kv, nk), 128)

    # ---- generation-aware VMEM budget ----------------------------------------
    try:
        cap = int(getattr(pltpu.get_tpu_info(), "vmem_capacity_bytes", 64 << 20))
    except Exception:  # noqa: BLE001
        cap = 64 << 20
    budget = int(cap * 0.8)        # leave headroom for compiler-internal scratch

    wfac = 1 if layout.single_buf else 2
    const_bytes = wfac * (
        sum(int(m.size) * m.dtype.itemsize
            for m in (wd1, wd2, wd3p, wvo, ffw1, ffw2, dnw, wh))
        + int(vecs.size) * vecs.dtype.itemsize)
    enc_w_bytes = 2 * (tkx + tky) * fd * 2      # double-buffered wa/wv K-blocks

    def vmem_estimate(rows):
        act_in = 2 * rows * (tkx + tky) * 2      # double-buffered bf16 inputs
        act_out = 2 * rows * (dh + pack_w) * 4   # double-buffered f32 outputs
        scratch = 2 * rows * fd * 4              # encoder f32 accumulators
        live = 6 * rows * max(4 * fd, 512) * 4   # live intermediates headroom
        return (const_bytes + enc_w_bytes + act_in + act_out + scratch + live
                + (4 << 20))

    while vmem_estimate(tb) > budget and tb > 16:
        tb = max(16, _round_up(tb // 2, 16))

    pb = _round_up(b, tb)
    pka, pkv = nk * tkx, nk * tky

    if pb != b or pka != ka:
        x_flat = jnp.pad(x_flat, ((0, pb - b), (0, pka - ka)))
    if pb != b or pkv != kv:
        y_flat = jnp.pad(y_flat, ((0, pb - b), (0, pkv - kv)))
    if pka != ka:
        wa = jnp.pad(wa, ((0, pka - ka), (0, 0)))
    if pkv != kv:
        wv = jnp.pad(wv, ((0, pkv - kv), (0, 0)))

    grid = (pb // tb, nk)

    if layout.single_buf:
        def const_spec(arr):
            # Resident weights: constant index_map never re-DMAs, so a single
            # buffer halves their VMEM footprint.
            return pl.BlockSpec(arr.shape, lambda i, k: (0, 0),
                                pipeline_mode=pl.Buffered(1))
    else:
        def const_spec(arr):
            return pl.BlockSpec(arr.shape, lambda i, k: (0, 0))

    in_specs = [
        pl.BlockSpec((tb, tkx), lambda i, k: (i, k)),        # x (bf16)
        pl.BlockSpec((tb, tky), lambda i, k: (i, k)),        # y (bf16)
        const_spec(vecs),                                     # stacked biases/LN
        pl.BlockSpec((tkx, fd), lambda i, k: (k, 0)),         # wa (K-blocked)
        pl.BlockSpec((tky, fd), lambda i, k: (k, 0)),         # wv (K-blocked)
        const_spec(wd1), const_spec(wd2), const_spec(wd3p),
        const_spec(wvo), const_spec(ffw1), const_spec(ffw2),
        const_spec(dnw), const_spec(wh),
    ]
    operands = (x_flat, y_flat, vecs, wa, wv, wd1, wd2, wd3p,
                wvo, ffw1, ffw2, dnw, wh)
    assert len(in_specs) == len(operands)   # specs generated from operand list

    out_specs = (pl.BlockSpec((tb, dh), lambda i, k: (i, 0)),
                 pl.BlockSpec((tb, pack_w), lambda i, k: (i, 0)))
    out_shape = (jax.ShapeDtypeStruct((pb, dh), jnp.float32),
                 jax.ShapeDtypeStruct((pb, pack_w), jnp.float32))

    kernel = functools.partial(
        avfdti_kernel, num_class=nc,
        off_det=layout.off_det, off_o=layout.off_o, off_p=layout.off_p)

    vmem_limit = int(min(budget, max(vmem_estimate(tb), 32 << 20)))

    x_out, packed = pl.pallas_call(
        kernel,
        out_shape=out_shape,
        grid_spec=pltpu.PrefetchScalarGridSpec(
            num_scalar_prefetch=0,
            grid=grid,
            in_specs=in_specs,
            out_specs=out_specs,
            scratch_shapes=[pltpu.VMEM((tb, fd), jnp.float32),
                            pltpu.VMEM((tb, fd), jnp.float32)]),
        compiler_params=pltpu.CompilerParams(
            dimension_semantics=("parallel", "arbitrary"),
            vmem_limit_bytes=vmem_limit),
    )(*operands)

    detect = packed[:b, layout.off_det:layout.off_det + 2]
    o = packed[:b, layout.off_o:layout.off_o + nc]
    p_soft = packed[:b, layout.off_p:layout.off_p + nc]
    c = packed[:b, layout.off_c:layout.off_c + layout.kernel_num]
    t = packed[:b, layout.off_t:layout.off_t + 2]
    # PyTorch forward returns (x, p, o, detect, t, c)
    return x_out[:b], p_soft, o, detect, t, c


# ----------------------------------------------------------------------------
# Main
# ----------------------------------------------------------------------------
if __name__ == "__main__":
    key = jax.random.PRNGKey(0)
    kx, ky, kp = jax.random.split(key, 3)

    batch = 2
    feature_dim = 128   # module default is 512; kept small for the smoke test
    kernel_num = 32
    num_class = 6

    # NCHW inputs: x = audio spectrogram, y = visual frames.
    x = jax.random.normal(kx, (batch, 1, 16, 16), jnp.float32)
    y = jax.random.normal(ky, (batch, 3, 16, 16), jnp.float32)

    raw = init_params(kp,
                      audio_in=1 * 16 * 16,
                      visual_in=3 * 16 * 16,
                      feature_dim=feature_dim,
                      kernel_num=kernel_num,
                      num_class=num_class)
    mats, vecs, layout = prepare_params(raw, num_class=num_class,
                                        kernel_num=kernel_num)

    outs = avfdti_forward(mats, vecs, x, y, layout=layout)
    jax.block_until_ready(outs)

    x_out, p_soft, o, detect, t, c = outs
    assert x_out.shape == (batch, 256)
    assert p_soft.shape == (batch, num_class)
    assert o.shape == (batch, num_class)
    assert detect.shape == (batch, 2)
    assert t.shape == (batch, 2)
    assert c.shape == (batch, kernel_num)
    assert bool(jnp.all(jnp.isfinite(p_soft)))
    assert bool(jnp.all(jnp.isfinite(x_out)))
    # approx (EUP) reciprocal in the softmax denominator -> relaxed tolerance
    assert bool(jnp.allclose(jnp.sum(p_soft, axis=-1), 1.0, atol=2e-2))

    print("KERNEL_OK")
</pallas_src>

<mosaic_0001>
module attributes {stable_mosaic.version = 11 : i64} {
  func.func @_probe(%arg0: i32, %arg1: memref<8x128xf32, #tpu.memory_space<vmem>>, %arg2: memref<8x128xf32, #tpu.memory_space<vmem>>) attributes {dimension_semantics = [#tpu.dimension_semantics<arbitrary>], iteration_bounds = array<i64: 1>, scalar_prefetch = 0 : i64, scratch_operands = 0 : i64, tpu.core_type = #tpu.core_type<tc>, window_params = [{pipeline_mode = #tpu.pipeline_mode<synchronous>, transform_indices = @transform_0, window_bounds = array<i64: 8, 128>}, {pipeline_mode = #tpu.pipeline_mode<synchronous>, transform_indices = @transform_1, window_bounds = array<i64: 8, 128>}]} {
    %c0 = arith.constant 0 : index
    %c0_0 = arith.constant 0 : index
    %0 = vector.load %arg1[%c0, %c0_0] : memref<8x128xf32, #tpu.memory_space<vmem>>, vector<8x128xf32>
    %cst = arith.constant 1.000000e+00 : f32
    %1 = vector.broadcast %cst : f32 to vector<8x128xf32>
    %2 = arith.addf %0, %1 : vector<8x128xf32>
    %c0_1 = arith.constant 0 : index
    %c0_2 = arith.constant 0 : index
    %3 = vector.load %arg2[%c0_1, %c0_2] : memref<8x128xf32, #tpu.memory_space<vmem>>, vector<8x128xf32>
    tpu.vector_store %arg2[%c0_1, %c0_2], %2 {strides = array<i32>} : memref<8x128xf32, #tpu.memory_space<vmem>>, vector<8x128xf32>,
    return
  }
  func.func @transform_0(%arg0: i32) -> (i32, i32) {
    %c0_i32 = arith.constant 0 : i32
    %c0_i32_0 = arith.constant 0 : i32
    %c0_i32_1 = arith.constant 0 : i32
    return %c0_i32, %c0_i32_0 : i32, i32
  }
  func.func @transform_1(%arg0: i32) -> (i32, i32) {
    %c0_i32 = arith.constant 0 : i32
    %c0_i32_0 = arith.constant 0 : i32
    %c0_i32_1 = arith.constant 0 : i32
    return %c0_i32, %c0_i32_0 : i32, i32
  }
}

module attributes {stable_mosaic.version = 11 : i64} {
  func.func @avfdti_kernel(%arg0: i32, %arg1: i32, %arg2: memref<16x256xbf16, #tpu.memory_space<vmem>>, %arg3: memref<16x768xbf16, #tpu.memory_space<vmem>>, %arg4: memref<14x512xf32, #tpu.memory_space<vmem>>, %arg5: memref<256x128xbf16, #tpu.memory_space<vmem>>, %arg6: memref<768x128xbf16, #tpu.memory_space<vmem>>, %arg7: memref<128x256xbf16, #tpu.memory_space<vmem>>, %arg8: memref<256x128xbf16, #tpu.memory_space<vmem>>, %arg9: memref<128x128xbf16, #tpu.memory_space<vmem>>, %arg10: memref<128x128xbf16, #tpu.memory_space<vmem>>, %arg11: memref<128x512xbf16, #tpu.memory_space<vmem>>, %arg12: memref<512x128xbf16, #tpu.memory_space<vmem>>, %arg13: memref<128x256xbf16, #tpu.memory_space<vmem>>, %arg14: memref<256x128xbf16, #tpu.memory_space<vmem>>, %arg15: memref<16x256xf32, #tpu.memory_space<vmem>>, %arg16: memref<16x128xf32, #tpu.memory_space<vmem>>, %arg17: memref<16x128xf32, #tpu.memory_space<vmem>>, %arg18: memref<16x128xf32, #tpu.memory_space<vmem>>) attributes {dimension_semantics = [#tpu.dimension_semantics<parallel>, #tpu.dimension_semantics<arbitrary>], iteration_bounds = array<i64: 1, 1>, scalar_prefetch = 0 : i64, scratch_operands = 2 : i64, tpu.core_type = #tpu.core_type<tc>, window_params = [{transform_indices = @transform_0, window_bounds = array<i64: 16, 256>}, {transform_indices = @transform_1, window_bounds = array<i64: 16, 768>}, {pipeline_mode = #tpu.pipeline_mode<synchronous>, transform_indices = @transform_2, window_bounds = array<i64: 14, 512>}, {transform_indices = @transform_3, window_bounds = array<i64: 256, 128>}, {transform_indices = @transform_4, window_bounds = array<i64: 768, 128>}, {pipeline_mode = #tpu.pipeline_mode<synchronous>, transform_indices = @transform_5, window_bounds = array<i64: 128, 256>}, {pipeline_mode = #tpu.pipeline_mode<synchronous>, transform_indices = @transform_6, window_bounds = array<i64: 256, 128>}, {pipeline_mode = #tpu.pipeline_mode<synchronous>, transform_indices = @transform_7, window_bounds = array<i64: 128, 128>}, {pipeline_mode = #tpu.pipeline_mode<synchronous>, transform_indices = @transform_8, window_bounds = array<i64: 128, 128>}, {pipeline_mode = #tpu.pipeline_mode<synchronous>, transform_indices = @transform_9, window_bounds = array<i64: 128, 512>}, {pipeline_mode = #tpu.pipeline_mode<synchronous>, transform_indices = @transform_10, window_bounds = array<i64: 512, 128>}, {pipeline_mode = #tpu.pipeline_mode<synchronous>, transform_indices = @transform_11, window_bounds = array<i64: 128, 256>}, {pipeline_mode = #tpu.pipeline_mode<synchronous>, transform_indices = @transform_12, window_bounds = array<i64: 256, 128>}, {transform_indices = @transform_13, window_bounds = array<i64: 16, 256>}, {transform_indices = @transform_14, window_bounds = array<i64: 16, 128>}]} {
    %c0_i32 = arith.constant 0 : i32
    %0 = arith.cmpi eq, %arg1, %c0_i32 : i32
    %1 = arith.extui %0 : i1 to i32
    %c0_i32_0 = arith.constant 0 : i32
    %2 = arith.cmpi ne, %1, %c0_i32_0 : i32
    scf.if %2 {
      %cst_19 = arith.constant 0.000000e+00 : f32
      %18 = vector.broadcast %cst_19 : f32 to vector<16x128xf32>
      %c0_20 = arith.constant 0 : index
      %c0_21 = arith.constant 0 : index
      %19 = vector.load %arg17[%c0_20, %c0_21] : memref<16x128xf32, #tpu.memory_space<vmem>>, vector<16x128xf32>
      tpu.vector_store %arg17[%c0_20, %c0_21], %18 {strides = array<i32>} : memref<16x128xf32, #tpu.memory_space<vmem>>, vector<16x128xf32>,
      %cst_22 = arith.constant 0.000000e+00 : f32
      %20 = vector.broadcast %cst_22 : f32 to vector<16x128xf32>
      %c0_23 = arith.constant 0 : index
      %c0_24 = arith.constant 0 : index
      %21 = vector.load %arg18[%c0_23, %c0_24] : memref<16x128xf32, #tpu.memory_space<vmem>>, vector<16x128xf32>
      tpu.vector_store %arg18[%c0_23, %c0_24], %20 {strides = array<i32>} : memref<16x128xf32, #tpu.memory_space<vmem>>, vector<16x128xf32>,
    } else {
    }
    %c0 = arith.constant 0 : index
    %c0_1 = arith.constant 0 : index
    %3 = vector.load %arg17[%c0, %c0_1] : memref<16x128xf32, #tpu.memory_space<vmem>>, vector<16x128xf32>
    %c0_2 = arith.constant 0 : index
    %c0_3 = arith.constant 0 : index
    %4 = vector.load %arg2[%c0_2, %c0_3] : memref<16x256xbf16, #tpu.memory_space<vmem>>, vector<16x256xbf16>
    %c0_4 = arith.constant 0 : index
    %c0_5 = arith.constant 0 : index
    %5 = vector.load %arg5[%c0_4, %c0_5] : memref<256x128xbf16, #tpu.memory_space<vmem>>, vector<256x128xbf16>
    %cst = arith.constant dense<0.000000e+00> : vector<16x128xf32>
    %6 = tpu.matmul %4, %5, %cst {dimension_numbers = #tpu.dot_dimension_numbers<[1], [0], [0], [1], [0, 0, 1, 1], [], []>} : vector<16x256xbf16>, vector<256x128xbf16>, vector<16x128xf32> -> vector<16x128xf32>
    %7 = arith.addf %3, %6 : vector<16x128xf32>
    %c0_6 = arith.constant 0 : index
    %c0_7 = arith.constant 0 : index
    %8 = vector.load %arg17[%c0_6, %c0_7] : memref<16x128xf32, #tpu.memory_space<vmem>>, vector<16x128xf32>
    tpu.vector_store %arg17[%c0_6, %c0_7], %7 {strides = array<i32>} : memref<16x128xf32, #tpu.memory_space<vmem>>, vector<16x128xf32>,
    %c0_8 = arith.constant 0 : index
    %c0_9 = arith.constant 0 : index
    %9 = vector.load %arg18[%c0_8, %c0_9] : memref<16x128xf32, #tpu.memory_space<vmem>>, vector<16x128xf32>
    %c0_10 = arith.constant 0 : index
    %c0_11 = arith.constant 0 : index
    %10 = vector.load %arg3[%c0_10, %c0_11] : memref<16x768xbf16, #tpu.memory_space<vmem>>, vector<16x768xbf16>
    %c0_12 = arith.constant 0 : index
    %c0_13 = arith.constant 0 : index
    %11 = vector.load %arg6[%c0_12, %c0_13] : memref<768x128xbf16, #tpu.memory_space<vmem>>, vector<768x128xbf16>
    %cst_14 = arith.constant dense<0.000000e+00> : vector<16x128xf32>
    %12 = tpu.matmul %10, %11, %cst_14 {dimension_numbers = #tpu.dot_dimension_numbers<[1], [0], [0], [1], [0, 0, 1, 1], [], []>} : vector<16x768xbf16>, vector<768x128xbf16>, vector<16x128xf32> -> vector<16x128xf32>
    %13 = arith.addf %9, %12 : vector<16x128xf32>
    %c0_15 = arith.constant 0 : index
    %c0_16 = arith.constant 0 : index
    %14 = vector.load %arg18[%c0_15, %c0_16] : memref<16x128xf32, #tpu.memory_space<vmem>>, vector<16x128xf32>
    tpu.vector_store %arg18[%c0_15, %c0_16], %13 {strides = array<i32>} : memref<16x128xf32, #tpu.memory_space<vmem>>, vector<16x128xf32>,
    %c0_i32_17 = arith.constant 0 : i32
    %15 = arith.cmpi eq, %arg1, %c0_i32_17 : i32
    %16 = arith.extui %15 : i1 to i32
    %c0_i32_18 = arith.constant 0 : i32
    %17 = arith.cmpi ne, %16, %c0_i32_18 : i32
    scf.if %17 {
      %c0_19 = arith.constant 0 : index
      %c0_20 = arith.constant 0 : index
      %18 = vector.load %arg17[%c0_19, %c0_20] : memref<16x128xf32, #tpu.memory_space<vmem>>, vector<16x128xf32>
      %c0_21 = arith.constant 0 : index
      %c0_22 = arith.constant 0 : index
      %19 = vector.load %arg4[%c0_21, %c0_22] : memref<14x512xf32, #tpu.memory_space<vmem>>, vector<1x128xf32>
      %20 = vector.broadcast %19 : vector<1x128xf32> to vector<16x128xf32>
      %21 = arith.addf %18, %20 : vector<16x128xf32>
      %cst_23 = arith.constant 0.000000e+00 : f32
      %22 = vector.broadcast %cst_23 : f32 to vector<16x128xf32>
      %23 = arith.maximumf %21, %22 : vector<16x128xf32>
      %c0_24 = arith.constant 0 : index
      %c0_25 = arith.constant 0 : index
      %24 = vector.load %arg18[%c0_24, %c0_25] : memref<16x128xf32, #tpu.memory_space<vmem>>, vector<16x128xf32>
      %c1 = arith.constant 1 : index
      %c0_26 = arith.constant 0 : index
      %25 = vector.load %arg4[%c1, %c0_26] : memref<14x512xf32, #tpu.memory_space<vmem>>, vector<1x128xf32>
      %26 = vector.broadcast %25 : vector<1x128xf32> to vector<16x128xf32>
      %27 = arith.addf %24, %26 : vector<16x128xf32>
      %cst_27 = arith.constant 0.000000e+00 : f32
      %28 = vector.broadcast %cst_27 : f32 to vector<16x128xf32>
      %29 = arith.maximumf %27, %28 : vector<16x128xf32>
      %30 = arith.truncf %29 : vector<16x128xf32> to vector<16x128xbf16>
      %c0_28 = arith.constant 0 : index
      %c0_29 = arith.constant 0 : index
      %31 = vector.load %arg7[%c0_28, %c0_29] : memref<128x256xbf16, #tpu.memory_space<vmem>>, vector<128x256xbf16>
      %cst_30 = arith.constant dense<0.000000e+00> : vector<16x256xf32>
      %32 = tpu.matmul %30, %31, %cst_30 {dimension_numbers = #tpu.dot_dimension_numbers<[1], [0], [0], [1], [0, 0, 1, 1], [], []>} : vector<16x128xbf16>, vector<128x256xbf16>, vector<16x256xf32> -> vector<16x256xf32>
      %c2 = arith.constant 2 : index
      %c0_31 = arith.constant 0 : index
      %33 = vector.load %arg4[%c2, %c0_31] : memref<14x512xf32, #tpu.memory_space<vmem>>, vector<1x256xf32>
      %34 = vector.broadcast %33 : vector<1x256xf32> to vector<16x256xf32>
      %35 = arith.addf %32, %34 : vector<16x256xf32>
      %cst_32 = arith.constant 0.000000e+00 : f32
      %36 = vector.broadcast %cst_32 : f32 to vector<16x256xf32>
      %37 = arith.maximumf %35, %36 : vector<16x256xf32>
      %38 = arith.truncf %37 : vector<16x256xf32> to vector<16x256xbf16>
      %c0_33 = arith.constant 0 : index
      %c0_34 = arith.constant 0 : index
      %39 = vector.load %arg8[%c0_33, %c0_34] : memref<256x128xbf16, #tpu.memory_space<vmem>>, vector<256x128xbf16>
      %cst_35 = arith.constant dense<0.000000e+00> : vector<16x128xf32>
      %40 = tpu.matmul %38, %39, %cst_35 {dimension_numbers = #tpu.dot_dimension_numbers<[1], [0], [0], [1], [0, 0, 1, 1], [], []>} : vector<16x256xbf16>, vector<256x128xbf16>, vector<16x128xf32> -> vector<16x128xf32>
      %c3 = arith.constant 3 : index
      %c0_36 = arith.constant 0 : index
      %41 = vector.load %arg4[%c3, %c0_36] : memref<14x512xf32, #tpu.memory_space<vmem>>, vector<1x128xf32>
      %42 = vector.broadcast %41 : vector<1x128xf32> to vector<16x128xf32>
      %43 = arith.addf %40, %42 : vector<16x128xf32>
      %cst_37 = arith.constant 0.000000e+00 : f32
      %44 = vector.broadcast %cst_37 : f32 to vector<16x128xf32>
      %45 = arith.maximumf %43, %44 : vector<16x128xf32>
      %46 = arith.truncf %45 : vector<16x128xf32> to vector<16x128xbf16>
      %c0_38 = arith.constant 0 : index
      %c0_39 = arith.constant 0 : index
      %47 = vector.load %arg9[%c0_38, %c0_39] : memref<128x128xbf16, #tpu.memory_space<vmem>>, vector<128x128xbf16>
      %cst_40 = arith.constant dense<0.000000e+00> : vector<16x128xf32>
      %48 = tpu.matmul %46, %47, %cst_40 {dimension_numbers = #tpu.dot_dimension_numbers<[1], [0], [0], [1], [0, 0, 1, 1], [], []>} : vector<16x128xbf16>, vector<128x128xbf16>, vector<16x128xf32> -> vector<16x128xf32>
      %c4 = arith.constant 4 : index
      %c0_41 = arith.constant 0 : index
      %49 = vector.load %arg4[%c4, %c0_41] : memref<14x512xf32, #tpu.memory_space<vmem>>, vector<1x128xf32>
      %50 = vector.broadcast %49 : vector<1x128xf32> to vector<16x128xf32>
      %51 = arith.addf %48, %50 : vector<16x128xf32>
      %52 = vector.extract_strided_slice %51 {offsets = [0, 0], sizes = [16, 1], strides = [1, 1]} : vector<16x128xf32> to vector<16x1xf32>
      %53 = vector.extract_strided_slice %51 {offsets = [0, 1], sizes = [16, 1], strides = [1, 1]} : vector<16x128xf32> to vector<16x1xf32>
      %54 = arith.maximumf %52, %53 : vector<16x1xf32>
      %55 = arith.subf %52, %54 : vector<16x1xf32>
      %56 = math.exp %55 : vector<16x1xf32>
      %57 = arith.subf %53, %54 : vector<16x1xf32>
      %58 = math.exp %57 : vector<16x1xf32>
      %59 = arith.addf %56, %58 : vector<16x1xf32>
      %60 = tpu.reciprocal %59 {approx = true} : vector<16x1xf32> -> vector<16x1xf32>
      %61 = arith.mulf %56, %60 : vector<16x1xf32>
      %62 = vector.broadcast %61 : vector<16x1xf32> to vector<16x128xf32>
      %63 = arith.mulf %62, %23 : vector<16x128xf32>
      %64 = arith.mulf %58, %60 : vector<16x1xf32>
      %65 = vector.broadcast %64 : vector<16x1xf32> to vector<16x128xf32>
      %66 = arith.mulf %65, %29 : vector<16x128xf32>
      %67 = arith.addf %63, %66 : vector<16x128xf32>
      %68 = arith.truncf %67 : vector<16x128xf32> to vector<16x128xbf16>
      %c0_42 = arith.constant 0 : index
      %c0_43 = arith.constant 0 : index
      %69 = vector.load %arg10[%c0_42, %c0_43] : memref<128x128xbf16, #tpu.memory_space<vmem>>, vector<128x128xbf16>
      %cst_44 = arith.constant dense<0.000000e+00> : vector<16x128xf32>
      %70 = tpu.matmul %68, %69, %cst_44 {dimension_numbers = #tpu.dot_dimension_numbers<[1], [0], [0], [1], [0, 0, 1, 1], [], []>} : vector<16x128xbf16>, vector<128x128xbf16>, vector<16x128xf32> -> vector<16x128xf32>
      %c5 = arith.constant 5 : index
      %c0_45 = arith.constant 0 : index
      %71 = vector.load %arg4[%c5, %c0_45] : memref<14x512xf32, #tpu.memory_space<vmem>>, vector<1x128xf32>
      %72 = vector.broadcast %71 : vector<1x128xf32> to vector<16x128xf32>
      %73 = arith.addf %70, %72 : vector<16x128xf32>
      %74 = arith.addf %67, %73 : vector<16x128xf32>
      %c6 = arith.constant 6 : index
      %c0_46 = arith.constant 0 : index
      %75 = vector.load %arg4[%c6, %c0_46] : memref<14x512xf32, #tpu.memory_space<vmem>>, vector<1x128xf32>
      %c7 = arith.constant 7 : index
      %c0_47 = arith.constant 0 : index
      %76 = vector.load %arg4[%c7, %c0_47] : memref<14x512xf32, #tpu.memory_space<vmem>>, vector<1x128xf32>
      %cst_48 = arith.constant dense<0.000000e+00> : vector<16xf32>
      %77 = vector.multi_reduction <add>, %74, %cst_48 [1] : vector<16x128xf32> to vector<16xf32>
      %78 = vector.shape_cast %77 : vector<16xf32> to vector<16x1xf32>
      %cst_49 = arith.constant 1.280000e+02 : f32
      %79 = vector.broadcast %cst_49 : f32 to vector<16x1xf32>
      %80 = arith.divf %78, %79 : vector<16x1xf32>
      %81 = arith.mulf %74, %74 : vector<16x128xf32>
      %cst_50 = arith.constant dense<0.000000e+00> : vector<16xf32>
      %82 = vector.multi_reduction <add>, %81, %cst_50 [1] : vector<16x128xf32> to vector<16xf32>
      %83 = vector.shape_cast %82 : vector<16xf32> to vector<16x1xf32>
      %cst_51 = arith.constant 1.280000e+02 : f32
      %84 = vector.broadcast %cst_51 : f32 to vector<16x1xf32>
      %85 = arith.divf %83, %84 : vector<16x1xf32>
      %86 = arith.mulf %80, %80 : vector<16x1xf32>
      %87 = arith.subf %85, %86 : vector<16x1xf32>
      %88 = vector.broadcast %80 : vector<16x1xf32> to vector<16x128xf32>
      %89 = arith.subf %74, %88 : vector<16x128xf32>
      %cst_52 = arith.constant 9.99999974E-6 : f32
      %90 = vector.broadcast %cst_52 : f32 to vector<16x1xf32>
      %91 = arith.addf %87, %90 : vector<16x1xf32>
      %92 = math.rsqrt %91 : vector<16x1xf32>
      %93 = vector.broadcast %92 : vector<16x1xf32> to vector<16x128xf32>
      %94 = arith.mulf %89, %93 : vector<16x128xf32>
      %95 = vector.broadcast %75 : vector<1x128xf32> to vector<16x128xf32>
      %96 = arith.mulf %94, %95 : vector<16x128xf32>
      %97 = vector.broadcast %76 : vector<1x128xf32> to vector<16x128xf32>
      %98 = arith.addf %96, %97 : vector<16x128xf32>
      %99 = arith.truncf %98 : vector<16x128xf32> to vector<16x128xbf16>
      %c0_53 = arith.constant 0 : index
      %c0_54 = arith.constant 0 : index
      %100 = vector.load %arg11[%c0_53, %c0_54] : memref<128x512xbf16, #tpu.memory_space<vmem>>, vector<128x512xbf16>
      %cst_55 = arith.constant dense<0.000000e+00> : vector<16x512xf32>
      %101 = tpu.matmul %99, %100, %cst_55 {dimension_numbers = #tpu.dot_dimension_numbers<[1], [0], [0], [1], [0, 0, 1, 1], [], []>} : vector<16x128xbf16>, vector<128x512xbf16>, vector<16x512xf32> -> vector<16x512xf32>
      %c8 = arith.constant 8 : index
      %c0_56 = arith.constant 0 : index
      %102 = vector.load %arg4[%c8, %c0_56] : memref<14x512xf32, #tpu.memory_space<vmem>>, vector<1x512xf32>
      %103 = vector.broadcast %102 : vector<1x512xf32> to vector<16x512xf32>
      %104 = arith.addf %101, %103 : vector<16x512xf32>
      %cst_57 = arith.constant 0.000000e+00 : f32
      %105 = vector.broadcast %cst_57 : f32 to vector<16x512xf32>
      %106 = arith.maximumf %104, %105 : vector<16x512xf32>
      %107 = arith.truncf %106 : vector<16x512xf32> to vector<16x512xbf16>
      %c0_58 = arith.constant 0 : index
      %c0_59 = arith.constant 0 : index
      %108 = vector.load %arg12[%c0_58, %c0_59] : memref<512x128xbf16, #tpu.memory_space<vmem>>, vector<512x128xbf16>
      %cst_60 = arith.constant dense<0.000000e+00> : vector<16x128xf32>
      %109 = tpu.matmul %107, %108, %cst_60 {dimension_numbers = #tpu.dot_dimension_numbers<[1], [0], [0], [1], [0, 0, 1, 1], [], []>} : vector<16x512xbf16>, vector<512x128xbf16>, vector<16x128xf32> -> vector<16x128xf32>
      %c9 = arith.constant 9 : index
      %c0_61 = arith.constant 0 : index
      %110 = vector.load %arg4[%c9, %c0_61] : memref<14x512xf32, #tpu.memory_space<vmem>>, vector<1x128xf32>
      %111 = vector.broadcast %110 : vector<1x128xf32> to vector<16x128xf32>
      %112 = arith.addf %109, %111 : vector<16x128xf32>
      %113 = arith.addf %98, %112 : vector<16x128xf32>
      %c10 = arith.constant 10 : index
      %c0_62 = arith.constant 0 : index
      %114 = vector.load %arg4[%c10, %c0_62] : memref<14x512xf32, #tpu.memory_space<vmem>>, vector<1x128xf32>
      %c11 = arith.constant 11 : index
      %c0_63 = arith.constant 0 : index
      %115 = vector.load %arg4[%c11, %c0_63] : memref<14x512xf32, #tpu.memory_space<vmem>>, vector<1x128xf32>
      %cst_64 = arith.constant dense<0.000000e+00> : vector<16xf32>
      %116 = vector.multi_reduction <add>, %113, %cst_64 [1] : vector<16x128xf32> to vector<16xf32>
      %117 = vector.shape_cast %116 : vector<16xf32> to vector<16x1xf32>
      %cst_65 = arith.constant 1.280000e+02 : f32
      %118 = vector.broadcast %cst_65 : f32 to vector<16x1xf32>
      %119 = arith.divf %117, %118 : vector<16x1xf32>
      %120 = arith.mulf %113, %113 : vector<16x128xf32>
      %cst_66 = arith.constant dense<0.000000e+00> : vector<16xf32>
      %121 = vector.multi_reduction <add>, %120, %cst_66 [1] : vector<16x128xf32> to vector<16xf32>
      %122 = vector.shape_cast %121 : vector<16xf32> to vector<16x1xf32>
      %cst_67 = arith.constant 1.280000e+02 : f32
      %123 = vector.broadcast %cst_67 : f32 to vector<16x1xf32>
      %124 = arith.divf %122, %123 : vector<16x1xf32>
      %125 = arith.mulf %119, %119 : vector<16x1xf32>
      %126 = arith.subf %124, %125 : vector<16x1xf32>
      %127 = vector.broadcast %119 : vector<16x1xf32> to vector<16x128xf32>
      %128 = arith.subf %113, %127 : vector<16x128xf32>
      %cst_68 = arith.constant 9.99999974E-6 : f32
      %129 = vector.broadcast %cst_68 : f32 to vector<16x1xf32>
      %130 = arith.addf %126, %129 : vector<16x1xf32>
      %131 = math.rsqrt %130 : vector<16x1xf32>
      %132 = vector.broadcast %131 : vector<16x1xf32> to vector<16x128xf32>
      %133 = arith.mulf %128, %132 : vector<16x128xf32>
      %134 = vector.broadcast %114 : vector<1x128xf32> to vector<16x128xf32>
      %135 = arith.mulf %133, %134 : vector<16x128xf32>
      %136 = vector.broadcast %115 : vector<1x128xf32> to vector<16x128xf32>
      %137 = arith.addf %135, %136 : vector<16x128xf32>
      %138 = arith.truncf %137 : vector<16x128xf32> to vector<16x128xbf16>
      %c0_69 = arith.constant 0 : index
      %c0_70 = arith.constant 0 : index
      %139 = vector.load %arg13[%c0_69, %c0_70] : memref<128x256xbf16, #tpu.memory_space<vmem>>, vector<128x256xbf16>
      %cst_71 = arith.constant dense<0.000000e+00> : vector<16x256xf32>
      %140 = tpu.matmul %138, %139, %cst_71 {dimension_numbers = #tpu.dot_dimension_numbers<[1], [0], [0], [1], [0, 0, 1, 1], [], []>} : vector<16x128xbf16>, vector<128x256xbf16>, vector<16x256xf32> -> vector<16x256xf32>
      %c12 = arith.constant 12 : index
      %c0_72 = arith.constant 0 : index
      %141 = vector.load %arg4[%c12, %c0_72] : memref<14x512xf32, #tpu.memory_space<vmem>>, vector<1x256xf32>
      %142 = vector.broadcast %141 : vector<1x256xf32> to vector<16x256xf32>
      %143 = arith.addf %140, %142 : vector<16x256xf32>
      %cst_73 = arith.constant 0.000000e+00 : f32
      %144 = vector.broadcast %cst_73 : f32 to vector<16x256xf32>
      %145 = arith.maximumf %143, %144 : vector<16x256xf32>
      %c0_74 = arith.constant 0 : index
      %c0_75 = arith.constant 0 : index
      %146 = vector.load %arg15[%c0_74, %c0_75] : memref<16x256xf32, #tpu.memory_space<vmem>>, vector<16x256xf32>
      tpu.vector_store %arg15[%c0_74, %c0_75], %145 {strides = array<i32>} : memref<16x256xf32, #tpu.memory_space<vmem>>, vector<16x256xf32>,
      %147 = arith.truncf %145 : vector<16x256xf32> to vector<16x256xbf16>
      %c0_76 = arith.constant 0 : index
      %c0_77 = arith.constant 0 : index
      %148 = vector.load %arg14[%c0_76, %c0_77] : memref<256x128xbf16, #tpu.memory_space<vmem>>, vector<256x128xbf16>
      %cst_78 = arith.constant dense<0.000000e+00> : vector<16x128xf32>
      %149 = tpu.matmul %147, %148, %cst_78 {dimension_numbers = #tpu.dot_dimension_numbers<[1], [0], [0], [1], [0, 0, 1, 1], [], []>} : vector<16x256xbf16>, vector<256x128xbf16>, vector<16x128xf32> -> vector<16x128xf32>
      %c13 = arith.constant 13 : index
      %c0_79 = arith.constant 0 : index
      %150 = vector.load %arg4[%c13, %c0_79] : memref<14x512xf32, #tpu.memory_space<vmem>>, vector<1x128xf32>
      %151 = vector.broadcast %150 : vector<1x128xf32> to vector<16x128xf32>
      %152 = arith.addf %149, %151 : vector<16x128xf32>
      %153 = tpu.iota {dimensions = array<i32: 1>} : vector<16x128xi32>
      %c14_i32 = arith.constant 14 : i32
      %154 = vector.broadcast %c14_i32 : i32 to vector<16x128xi32>
      %155 = arith.cmpi sge, %153, %154 : vector<16x128xi32>
      %c20_i32 = arith.constant 20 : i32
      %156 = vector.broadcast %c20_i32 : i32 to vector<16x128xi32>
      %157 = arith.cmpi slt, %153, %156 : vector<16x128xi32>
      %158 = arith.andi %155, %157 : vector<16x128xi1>
      %cst_80 = arith.constant -1.000000e+30 : f32
      %159 = vector.broadcast %cst_80 : f32 to vector<16x128xf32>
      %160 = arith.select %158, %152, %159 : vector<16x128xi1>, vector<16x128xf32>
      %cst_81 = arith.constant dense<0xFF800000> : vector<16xf32>
      %161 = vector.multi_reduction <maximumf>, %160, %cst_81 [1] : vector<16x128xf32> to vector<16xf32>
      %162 = vector.shape_cast %161 : vector<16xf32> to vector<16x1xf32>
      %163 = vector.broadcast %162 : vector<16x1xf32> to vector<16x128xf32>
      %164 = arith.subf %160, %163 : vector<16x128xf32>
      %165 = math.exp %164 : vector<16x128xf32>
      %cst_82 = arith.constant dense<0.000000e+00> : vector<16xf32>
      %166 = vector.multi_reduction <add>, %165, %cst_82 [1] : vector<16x128xf32> to vector<16xf32>
      %167 = vector.shape_cast %166 : vector<16xf32> to vector<16x1xf32>
      %168 = tpu.reciprocal %167 {approx = true} : vector<16x1xf32> -> vector<16x1xf32>
      %169 = vector.broadcast %168 : vector<16x1xf32> to vector<16x128xf32>
      %170 = arith.mulf %165, %169 : vector<16x128xf32>
      %171 = arith.addf %152, %51 : vector<16x128xf32>
      %172 = arith.select %158, %170, %171 : vector<16x128xi1>, vector<16x128xf32>
      %c0_83 = arith.constant 0 : index
      %c0_84 = arith.constant 0 : index
      %173 = vector.load %arg16[%c0_83, %c0_84] : memref<16x128xf32, #tpu.memory_space<vmem>>, vector<16x128xf32>
      tpu.vector_store %arg16[%c0_83, %c0_84], %172 {strides = array<i32>} : memref<16x128xf32, #tpu.memory_space<vmem>>, vector<16x128xf32>,
    } else {
    }
    return
  }
  func.func @transform_0(%arg0: i32, %arg1: i32) -> (i32, i32) {
    %c0_i32 = arith.constant 0 : i32
    return %arg0, %arg1 : i32, i32
  }
  func.func @transform_1(%arg0: i32, %arg1: i32) -> (i32, i32) {
    %c0_i32 = arith.constant 0 : i32
    return %arg0, %arg1 : i32, i32
  }
  func.func @transform_2(%arg0: i32, %arg1: i32) -> (i32, i32) {
    %c0_i32 = arith.constant 0 : i32
    %c0_i32_0 = arith.constant 0 : i32
    %c0_i32_1 = arith.constant 0 : i32
    return %c0_i32, %c0_i32_0 : i32, i32
  }
  func.func @transform_3(%arg0: i32, %arg1: i32) -> (i32, i32) {
    %c0_i32 = arith.constant 0 : i32
    %c0_i32_0 = arith.constant 0 : i32
    return %arg1, %c0_i32 : i32, i32
  }
  func.func @transform_4(%arg0: i32, %arg1: i32) -> (i32, i32) {
    %c0_i32 = arith.constant 0 : i32
    %c0_i32_0 = arith.constant 0 : i32
    return %arg1, %c0_i32 : i32, i32
  }
  func.func @transform_5(%arg0: i32, %arg1: i32) -> (i32, i32) {
    %c0_i32 = arith.constant 0 : i32
    %c0_i32_0 = arith.constant 0 : i32
    %c0_i32_1 = arith.constant 0 : i32
    return %c0_i32, %c0_i32_0 : i32, i32
  }
  func.func @transform_6(%arg0: i32, %arg1: i32) -> (i32, i32) {
    %c0_i32 = arith.constant 0 : i32
    %c0_i32_0 = arith.constant 0 : i32
    %c0_i32_1 = arith.constant 0 : i32
    return %c0_i32, %c0_i32_0 : i32, i32
  }
  func.func @transform_7(%arg0: i32, %arg1: i32) -> (i32, i32) {
    %c0_i32 = arith.constant 0 : i32
    %c0_i32_0 = arith.constant 0 : i32
    %c0_i32_1 = arith.constant 0 : i32
    return %c0_i32, %c0_i32_0 : i32, i32
  }
  func.func @transform_8(%arg0: i32, %arg1: i32) -> (i32, i32) {
    %c0_i32 = arith.constant 0 : i32
    %c0_i32_0 = arith.constant 0 : i32
    %c0_i32_1 = arith.constant 0 : i32
    return %c0_i32, %c0_i32_0 : i32, i32
  }
  func.func @transform_9(%arg0: i32, %arg1: i32) -> (i32, i32) {
    %c0_i32 = arith.constant 0 : i32
    %c0_i32_0 = arith.constant 0 : i32
    %c0_i32_1 = arith.constant 0 : i32
    return %c0_i32, %c0_i32_0 : i32, i32
  }
  func.func @transform_10(%arg0: i32, %arg1: i32) -> (i32, i32) {
    %c0_i32 = arith.constant 0 : i32
    %c0_i32_0 = arith.constant 0 : i32
    %c0_i32_1 = arith.constant 0 : i32
    return %c0_i32, %c0_i32_0 : i32, i32
  }
  func.func @transform_11(%arg0: i32, %arg1: i32) -> (i32, i32) {
    %c0_i32 = arith.constant 0 : i32
    %c0_i32_0 = arith.constant 0 : i32
    %c0_i32_1 = arith.constant 0 : i32
    return %c0_i32, %c0_i32_0 : i32, i32
  }
  func.func @transform_12(%arg0: i32, %arg1: i32) -> (i32, i32) {
    %c0_i32 = arith.constant 0 : i32
    %c0_i32_0 = arith.constant 0 : i32
    %c0_i32_1 = arith.constant 0 : i32
    return %c0_i32, %c0_i32_0 : i32, i32
  }
  func.func @transform_13(%arg0: i32, %arg1: i32) -> (i32, i32) {
    %c0_i32 = arith.constant 0 : i32
    %c0_i32_0 = arith.constant 0 : i32
    return %arg0, %c0_i32 : i32, i32
  }
  func.func @transform_14(%arg0: i32, %arg1: i32) -> (i32, i32) {
    %c0_i32 = arith.constant 0 : i32
    %c0_i32_0 = arith.constant 0 : i32
    return %arg0, %c0_i32 : i32, i32
  }
}

</mosaic_0001>

<llo_original>
// kernel: tpu_custom_call.1
$region0: #{tpu_custom_call.1}
  #allocation0 [shape = 'u32[]', space=smem, size = 0x4, offset = 0x4, fixed_abs, tag = 'smem constant byte address 0x4 - core index']
  #allocation1 [shape = 'u32[144,128]{1,0:T(1,128)}', space=vmem, size = 0x12000, scoped, tag = 'internal scratch']
  %s0 = inlined_call_operand.hbm [shape: f32[8,128], index: 0, kind: input, shape index: {}]
  %s1 = inlined_call_operand.hbm [shape: f32[8,128], index: 1, kind: output, shape index: {}]
  %s2 = sld [smem:[#allocation0]]
  $region18: #{tpu_custom_call.1} parent=0
    _
  %s4 = ssub.s32 1, %s2
  %s5 = scalar_select 0, %s4, %s2
  $region1: #{tpu_custom_call.1} parent=0
    #allocation2 [shape = 'u8[4096]{0}', space=vmem, size = 0x1000, scoped, tag = 'input window, operand 0, single buffered']
    #allocation3 [shape = 's32[1]{0}', space=sflag, size = 0x4, scoped, tag = 'scoped memory for tpu_custom_call.1']
    #allocation4 [shape = 's32[1]{0}', space=sflag, size = 0x4, scoped, tag = 'scoped memory for tpu_custom_call.1']
    #allocation5 [shape = 'u8[4096]{0}', space=vmem, size = 0x1000, scoped, tag = 'output window, operand 0, single buffered']
    %6 = vsyncpa [#allocation3], 0
    %7 = vsyncpa [#allocation4], 0
    // Predicated region
    $region2: #{tpu_custom_call.1} parent=1 // pred_check
      _
    $region3: #{tpu_custom_call.1} parent=1 // pred_check_branch
      %9 = sbr.rel (0) target = $region5
    $region4: #{tpu_custom_call.1} parent=1 // pred_region
      %s11 = ssub.s32 128, 128
      %12 = vsyncadd [#allocation3], %s11
      %s14 = sshll.u32 [#allocation2], 4
      %s15 = int_to_ptr.vmem [resolvable:$true] %s14
      %17 = dma.hbm_to_vmem [thread:$0]  %s0, 128, %s15, [#allocation3]
    $region5: #{tpu_custom_call.1} parent=1 // pred_fallthru
      _
    // Predicated region
    $region6: #{tpu_custom_call.1} parent=1 // pred_check
      _
    $region7: #{tpu_custom_call.1} parent=1 // pred_check_branch
      %19 = sbr.rel (0) target = $region9
    $region8: #{tpu_custom_call.1} parent=1 // pred_region
      %20 = dma.done [#allocation3], 128
    $region9: #{tpu_custom_call.1} parent=1 // pred_fallthru
      _
    %v21 = vld [vmem:[#allocation2] sm:$0xff]
    %v22 = vadd.f32 %v21, 1.0
    %23 = vst [vmem:[#allocation5] sm:$0xff] %v22
    // Predicated region
    $region10: #{tpu_custom_call.1} parent=1 // pred_check
      _
    $region11: #{tpu_custom_call.1} parent=1 // pred_check_branch
      %25 = sbr.rel (0) target = $region13
    $region12: #{tpu_custom_call.1} parent=1 // pred_region
      %s27 = ssub.s32 128, 128
      %28 = vsyncadd [#allocation4], %s27
      %s30 = sshll.u32 [#allocation5], 4
      %s31 = int_to_ptr.vmem [resolvable:$true] %s30
      %33 = dma.vmem_to_hbm [thread:$0]  %s31, 128, %s1, [#allocation4]
    $region13: #{tpu_custom_call.1} parent=1 // pred_fallthru
      _
    // Predicated region
    $region14: #{tpu_custom_call.1} parent=1 // pred_check
      _
    $region15: #{tpu_custom_call.1} parent=1 // pred_check_branch
      %35 = sbr.rel (0) target = $region17
    $region16: #{tpu_custom_call.1} parent=1 // pred_region
      %36 = dma.done [#allocation4], 128
    $region17: #{tpu_custom_call.1} parent=1 // pred_fallthru
      _
    %37 = vsyncpa [#allocation3], 1
    %38 = vsyncpa [#allocation4], 1

// kernel: avfdti_forward.1
$region0: #{avfdti_forward.1}
  #allocation0 [shape = 'u32[]', space=smem, size = 0x4, offset = 0x4, fixed_abs, tag = 'smem constant byte address 0x4 - core index']
  #allocation1 [shape = 'u32[144,128]{1,0:T(1,128)}', space=vmem, size = 0x12000, scoped, tag = 'internal scratch']
  #allocation2 [shape = 'f32[16,128]{1,0:T(8,128)}', space=vmem, size = 0x2000, scoped, tag = 'scratch operand']
  #allocation3 [shape = 'f32[16,128]{1,0:T(8,128)}', space=vmem, size = 0x2000, scoped, tag = 'scratch operand']
  %s0 = inlined_call_operand.vmem [shape: bf16[16,256], index: 0, kind: input, shape index: {}]
  %s1 = inlined_call_operand.vmem [shape: bf16[16,768], index: 1, kind: input, shape index: {}]
  %s2 = inlined_call_operand.hbm [shape: f32[14,512], index: 2, kind: input, shape index: {}]
  %s3 = inlined_call_operand.hbm [shape: bf16[256,128], index: 3, kind: input, shape index: {}]
  %s4 = inlined_call_operand.hbm [shape: bf16[768,128], index: 4, kind: input, shape index: {}]
  %s5 = inlined_call_operand.hbm [shape: bf16[128,256], index: 5, kind: input, shape index: {}]
  %s6 = inlined_call_operand.hbm [shape: bf16[256,128], index: 6, kind: input, shape index: {}]
  %s7 = inlined_call_operand.hbm [shape: bf16[128,128], index: 7, kind: input, shape index: {}]
  %s8 = inlined_call_operand.hbm [shape: bf16[128,128], index: 8, kind: input, shape index: {}]
  %s9 = inlined_call_operand.vmem [shape: bf16[128,512], index: 9, kind: input, shape index: {}]
  %s10 = inlined_call_operand.hbm [shape: bf16[512,128], index: 10, kind: input, shape index: {}]
  %s11 = inlined_call_operand.hbm [shape: bf16[128,256], index: 11, kind: input, shape index: {}]
  %s12 = inlined_call_operand.hbm [shape: bf16[256,128], index: 12, kind: input, shape index: {}]
  %s13 = inlined_call_operand.vmem [shape: f32[16,256], index: 13, kind: output, shape index: {0}]
  %s14 = inlined_call_operand.vmem [shape: f32[16,128], index: 14, kind: output, shape index: {1}]
  %15 = xla_tuple %s13, %s14
  %s16 = sld [smem:[#allocation0]]
  $region118: #{avfdti_forward.1} parent=0
    _
  %s18 = ssub.s32 1, %s16
  %s19 = scalar_select 0, %s18, %s16
  $region1: #{avfdti_forward.1} parent=0
    #allocation4 [shape = 'u8[32768]{0}', space=vmem, size = 0x8000, scoped, tag = 'input window, operand 2, single buffered']
    #allocation5 [shape = 's32[1]{0}', space=sflag, size = 0x4, scoped, tag = 'scoped memory for avfdti_forward.1']
    #allocation6 [shape = 'u8[65536]{0}', space=vmem, size = 0x10000, scoped, tag = 'input window, operand 3, single buffered']
    #allocation7 [shape = 's32[1]{0}', space=sflag, size = 0x4, scoped, tag = 'scoped memory for avfdti_forward.1']
    #allocation8 [shape = 'u8[196608]{0}', space=vmem, size = 0x30000, scoped, tag = 'input window, operand 4, single buffered']
    #allocation9 [shape = 'u8[65536]{0}', space=vmem, size = 0x10000, scoped, tag = 'input window, operand 5, single buffered']
    #allocation10 [shape = 's32[1]{0}', space=sflag, size = 0x4, scoped, tag = 'scoped memory for avfdti_forward.1']
    #allocation11 [shape = 'u8[65536]{0}', space=vmem, size = 0x10000, scoped, tag = 'input window, operand 6, single buffered']
    #allocation12 [shape = 'u8[32768]{0}', space=vmem, size = 0x8000, scoped, tag = 'input window, operand 7, single buffered']
    #allocation13 [shape = 's32[1]{0}', space=sflag, size = 0x4, scoped, tag = 'scoped memory for avfdti_forward.1']
    #allocation14 [shape = 'u8[32768]{0}', space=vmem, size = 0x8000, scoped, tag = 'input window, operand 8, single buffered']
    #allocation15 [shape = 'u8[131072]{0}', space=vmem, size = 0x20000, scoped, tag = 'input window, operand 10, single buffered']
    #allocation16 [shape = 's32[1]{0}', space=sflag, size = 0x4, scoped, tag = 'scoped memory for avfdti_forward.1']
    #allocation17 [shape = 'u8[65536]{0}', space=vmem, size = 0x10000, scoped, tag = 'input window, operand 11, single buffered']
    #allocation18 [shape = 'u8[65536]{0}', space=vmem, size = 0x10000, scoped, tag = 'input window, operand 12, single buffered']
    #allocation19 [shape = 's32[1]{0}', space=sflag, size = 0x4, scoped, tag = 'scoped memory for avfdti_forward.1']
    %20 = vsyncpa [#allocation5], 0
    %21 = vsyncpa [#allocation7], 0
    %22 = vsyncpa [#allocation10], 0
    %23 = vsyncpa [#allocation13], 0
    %24 = vsyncpa [#allocation16], 0
    %25 = vsyncpa [#allocation19], 0
    // Predicated region
    $region2: #{avfdti_forward.1} parent=1 // pred_check
      _
    $region3: #{avfdti_forward.1} parent=1 // pred_check_branch
      %27 = sbr.rel (0) target = $region5
    $region4: #{avfdti_forward.1} parent=1 // pred_region
      _
    $region5: #{avfdti_forward.1} parent=1 // pred_fallthru
      _
    // Predicated region
    $region6: #{avfdti_forward.1} parent=1 // pred_check
      _
    $region7: #{avfdti_forward.1} parent=1 // pred_check_branch
      %29 = sbr.rel (0) target = $region9
    $region8: #{avfdti_forward.1} parent=1 // pred_region
      _
    $region9: #{avfdti_forward.1} parent=1 // pred_fallthru
      _
    // Predicated region
    $region10: #{avfdti_forward.1} parent=1 // pred_check
      _
    $region11: #{avfdti_forward.1} parent=1 // pred_check_branch
      %31 = sbr.rel (0) target = $region13
    $region12: #{avfdti_forward.1} parent=1 // pred_region
      %s33 = ssub.s32 1024, 1024
      %34 = vsyncadd [#allocation5], %s33
      %s35 = sshll.u32 [#allocation4], 4
      %s36 = int_to_ptr.vmem [resolvable:$true] %s35
      %41 = dma.hbm_to_vmem [thread:$0]  %s2, 1024, %s36, [#allocation5], 512, 512, 32
    $region13: #{avfdti_forward.1} parent=1 // pred_fallthru
      _
    // Predicated region
    $region14: #{avfdti_forward.1} parent=1 // pred_check
      _
    $region15: #{avfdti_forward.1} parent=1 // pred_check_branch
      %43 = sbr.rel (0) target = $region17
    $region16: #{avfdti_forward.1} parent=1 // pred_region
      %s45 = ssub.s32 2048, 2048
      %46 = vsyncadd [#allocation7], %s45
      %s47 = sshll.u32 [#allocation6], 4
      %s48 = int_to_ptr.vmem [resolvable:$true] %s47
      %53 = dma.hbm_to_vmem [thread:$0]  %s3, 2048, %s48, [#allocation7], 64, 64, 4
    $region17: #{avfdti_forward.1} parent=1 // pred_fallthru
      _
    // Predicated region
    $region18: #{avfdti_forward.1} parent=1 // pred_check
      _
    $region19: #{avfdti_forward.1} parent=1 // pred_check_branch
      %55 = sbr.rel (0) target = $region21
    $region20: #{avfdti_forward.1} parent=1 // pred_region
      %s57 = ssub.s32 6144, 6144
      %58 = vsyncadd [#allocation7], %s57
      %s59 = sshll.u32 [#allocation8], 4
      %s60 = int_to_ptr.vmem [resolvable:$true] %s59
      %65 = dma.hbm_to_vmem [thread:$0]  %s4, 6144, %s60, [#allocation7], 64, 64, 4
    $region21: #{avfdti_forward.1} parent=1 // pred_fallthru
      _
    // Predicated region
    $region22: #{avfdti_forward.1} parent=1 // pred_check
      _
    $region23: #{avfdti_forward.1} parent=1 // pred_check_branch
      %67 = sbr.rel (0) target = $region25
    $region24: #{avfdti_forward.1} parent=1 // pred_region
      %s69 = ssub.s32 2048, 2048
      %70 = vsyncadd [#allocation10], %s69
      %s71 = sshll.u32 [#allocation9], 4
      %s72 = int_to_ptr.vmem [resolvable:$true] %s71
      %77 = dma.hbm_to_vmem [thread:$0]  %s5, 2048, %s72, [#allocation10], 128, 128, 8
    $region25: #{avfdti_forward.1} parent=1 // pred_fallthru
      _
    // Predicated region
    $region26: #{avfdti_forward.1} parent=1 // pred_check
      _
    $region27: #{avfdti_forward.1} parent=1 // pred_check_branch
      %79 = sbr.rel (0) target = $region29
    $region28: #{avfdti_forward.1} parent=1 // pred_region
      %s81 = ssub.s32 2048, 2048
      %82 = vsyncadd [#allocation10], %s81
      %s83 = sshll.u32 [#allocation11], 4
      %s84 = int_to_ptr.vmem [resolvable:$true] %s83
      %89 = dma.hbm_to_vmem [thread:$0]  %s6, 2048, %s84, [#allocation10], 64, 64, 4
    $region29: #{avfdti_forward.1} parent=1 // pred_fallthru
      _
    // Predicated region
    $region30: #{avfdti_forward.1} parent=1 // pred_check
      _
    $region31: #{avfdti_forward.1} parent=1 // pred_check_branch
      %91 = sbr.rel (0) target = $region33
    $region32: #{avfdti_forward.1} parent=1 // pred_region
      %s93 = ssub.s32 1024, 1024
      %94 = vsyncadd [#allocation13], %s93
      %s95 = sshll.u32 [#allocation12], 4
      %s96 = int_to_ptr.vmem [resolvable:$true] %s95
      %101 = dma.hbm_to_vmem [thread:$0]  %s7, 1024, %s96, [#allocation13], 64, 64, 4
    $region33: #{avfdti_forward.1} parent=1 // pred_fallthru
      _
    // Predicated region
    $region34: #{avfdti_forward.1} parent=1 // pred_check
      _
    $region35: #{avfdti_forward.1} parent=1 // pred_check_branch
      %103 = sbr.rel (0) target = $region37
    $region36: #{avfdti_forward.1} parent=1 // pred_region
      %s105 = ssub.s32 1024, 1024
      %106 = vsyncadd [#allocation13], %s105
      %s107 = sshll.u32 [#allocation14], 4
      %s108 = int_to_ptr.vmem [resolvable:$true] %s107
      %113 = dma.hbm_to_vmem [thread:$0]  %s8, 1024, %s108, [#allocation13], 64, 64, 4
    $region37: #{avfdti_forward.1} parent=1 // pred_fallthru
      _
    // Predicated region
    $region38: #{avfdti_forward.1} parent=1 // pred_check
      _
    $region39: #{avfdti_forward.1} parent=1 // pred_check_branch
      %115 = sbr.rel (0) target = $region41
    $region40: #{avfdti_forward.1} parent=1 // pred_region
      _
    $region41: #{avfdti_forward.1} parent=1 // pred_fallthru
      _
    // Predicated region
    $region42: #{avfdti_forward.1} parent=1 // pred_check
      _
    $region43: #{avfdti_forward.1} parent=1 // pred_check_branch
      %117 = sbr.rel (0) target = $region45
    $region44: #{avfdti_forward.1} parent=1 // pred_region
      %s119 = ssub.s32 4096, 4096
      %120 = vsyncadd [#allocation16], %s119
      %s121 = sshll.u32 [#allocation15], 4
      %s122 = int_to_ptr.vmem [resolvable:$true] %s121
      %127 = dma.hbm_to_vmem [thread:$0]  %s10, 4096, %s122, [#allocation16], 64, 64, 4
    $region45: #{avfdti_forward.1} parent=1 // pred_fallthru
      _
    // Predicated region
    $region46: #{avfdti_forward.1} parent=1 // pred_check
      _
    $region47: #{avfdti_forward.1} parent=1 // pred_check_branch
      %129 = sbr.rel (0) target = $region49
    $region48: #{avfdti_forward.1} parent=1 // pred_region
      %s131 = ssub.s32 2048, 2048
      %132 = vsyncadd [#allocation16], %s131
      %s133 = sshll.u32 [#allocation17], 4
      %s134 = int_to_ptr.vmem [resolvable:$true] %s133
      %139 = dma.hbm_to_vmem [thread:$0]  %s11, 2048, %s134, [#allocation16], 128, 128, 8
    $region49: #{avfdti_forward.1} parent=1 // pred_fallthru
      _
    // Predicated region
    $region50: #{avfdti_forward.1} parent=1 // pred_check
      _
    $region51: #{avfdti_forward.1} parent=1 // pred_check_branch
      %141 = sbr.rel (0) target = $region53
    $region52: #{avfdti_forward.1} parent=1 // pred_region
      %s143 = ssub.s32 2048, 2048
      %144 = vsyncadd [#allocation19], %s143
      %s145 = sshll.u32 [#allocation18], 4
      %s146 = int_to_ptr.vmem [resolvable:$true] %s145
      %151 = dma.hbm_to_vmem [thread:$0]  %s12, 2048, %s146, [#allocation19], 64, 64, 4
    $region53: #{avfdti_forward.1} parent=1 // pred_fallthru
      _
    // Predicated region
    $region54: #{avfdti_forward.1} parent=1 // pred_check
      _
    $region55: #{avfdti_forward.1} parent=1 // pred_check_branch
      %153 = sbr.rel (0) target = $region57
    $region56: #{avfdti_forward.1} parent=1 // pred_region
      %154 = dma.done [#allocation5], 1024
    $region57: #{avfdti_forward.1} parent=1 // pred_fallthru
      _
    // Predicated region
    $region58: #{avfdti_forward.1} parent=1 // pred_check
      _
    $region59: #{avfdti_forward.1} parent=1 // pred_check_branch
      %156 = sbr.rel (0) target = $region61
    $region60: #{avfdti_forward.1} parent=1 // pred_region
      %157 = dma.done [#allocation7], 2048
    $region61: #{avfdti_forward.1} parent=1 // pred_fallthru
      _
    // Predicated region
    $region62: #{avfdti_forward.1} parent=1 // pred_check
      _
    $region63: #{avfdti_forward.1} parent=1 // pred_check_branch
      %159 = sbr.rel (0) target = $region65
    $region64: #{avfdti_forward.1} parent=1 // pred_region
      %160 = dma.done [#allocation7], 6144
    $region65: #{avfdti_forward.1} parent=1 // pred_fallthru
      _
    // Predicated region
    $region66: #{avfdti_forward.1} parent=1 // pred_check
      _
    $region67: #{avfdti_forward.1} parent=1 // pred_check_branch
      %162 = sbr.rel (0) target = $region69
    $region68: #{avfdti_forward.1} parent=1 // pred_region
      %163 = dma.done [#allocation10], 2048
    $region69: #{avfdti_forward.1} parent=1 // pred_fallthru
      _
    // Predicated region
    $region70: #{avfdti_forward.1} parent=1 // pred_check
      _
    $region71: #{avfdti_forward.1} parent=1 // pred_check_branch
      %165 = sbr.rel (0) target = $region73
    $region72: #{avfdti_forward.1} parent=1 // pred_region
      %166 = dma.done [#allocation10], 2048
    $region73: #{avfdti_forward.1} parent=1 // pred_fallthru
      _
    // Predicated region
    $region74: #{avfdti_forward.1} parent=1 // pred_check
      _
    $region75: #{avfdti_forward.1} parent=1 // pred_check_branch
      %168 = sbr.rel (0) target = $region77
    $region76: #{avfdti_forward.1} parent=1 // pred_region
      %169 = dma.done [#allocation13], 1024
    $region77: #{avfdti_forward.1} parent=1 // pred_fallthru
      _
    // Predicated region
    $region78: #{avfdti_forward.1} parent=1 // pred_check
      _
    $region79: #{avfdti_forward.1} parent=1 // pred_check_branch
      %171 = sbr.rel (0) target = $region81
    $region80: #{avfdti_forward.1} parent=1 // pred_region
      %172 = dma.done [#allocation13], 1024
    $region81: #{avfdti_forward.1} parent=1 // pred_fallthru
      _
    // Predicated region
    $region82: #{avfdti_forward.1} parent=1 // pred_check
      _
    $region83: #{avfdti_forward.1} parent=1 // pred_check_branch
      %174 = sbr.rel (0) target = $region85
    $region84: #{avfdti_forward.1} parent=1 // pred_region
      %175 = dma.done [#allocation16], 4096
    $region85: #{avfdti_forward.1} parent=1 // pred_fallthru
      _
    // Predicated region
    $region86: #{avfdti_forward.1} parent=1 // pred_check
      _
    $region87: #{avfdti_forward.1} parent=1 // pred_check_branch
      %177 = sbr.rel (0) target = $region89
    $region88: #{avfdti_forward.1} parent=1 // pred_region
      %178 = dma.done [#allocation16], 2048
    $region89: #{avfdti_forward.1} parent=1 // pred_fallthru
      _
    // Predicated region
    $region90: #{avfdti_forward.1} parent=1 // pred_check
      _
    $region91: #{avfdti_forward.1} parent=1 // pred_check_branch
      %180 = sbr.rel (0) target = $region93
    $region92: #{avfdti_forward.1} parent=1 // pred_region
      %181 = dma.done [#allocation19], 2048
    $region93: #{avfdti_forward.1} parent=1 // pred_fallthru
      _
    %p183 = scmp.eq.s32.totalorder 0, 0
    // Predicated region
    $region94: #{avfdti_forward.1} parent=1 // pred_check
      %p184 = pneg %p183
    $region95: #{avfdti_forward.1} parent=1 // pred_check_branch
      %186 = sbr.rel (%p184) target = $region97
    $region96: #{avfdti_forward.1} parent=1 // pred_region
      %187 = vst [vmem:[#allocation2] sm:$0xff] 0.0
      %188 = vst [vmem:[#allocation2 + $0x8] sm:$0xff] 0.0
      %189 = vst [vmem:[#allocation3] sm:$0xff] 0.0
      %190 = vst [vmem:[#allocation3 + $0x8] sm:$0xff] 0.0
    $region97: #{avfdti_forward.1} parent=1 // pred_fallthru
      _
    %v191 = vld [vmem:[#allocation2] sm:$0xff]
    %v192 = vld [vmem:[#allocation2 + $0x8] sm:$0xff]
    %v193 = vld [vmem:[%s0] sm:$0xff]
    %v194 = vld [vmem:[%s0 + $0x8] sm:$0xff]
    %v195 = vld [vmem:[#allocation6] sm:$0xf]
    %v196 = vld [vmem:[#allocation6 + $0x4] sm:$0xf]
    %v197 = vld [vmem:[#allocation6 + $0x8] sm:$0xf]
    %v198 = vld [vmem:[#allocation6 + $0xc] sm:$0xf]
    %v199 = vld [vmem:[#allocation6 + $0x10] sm:$0xf]
    %v200 = vld [vmem:[#allocation6 + $0x14] sm:$0xf]
    %v201 = vld [vmem:[#allocation6 + $0x18] sm:$0xf]
    %v202 = vld [vmem:[#allocation6 + $0x1c] sm:$0xf]
    %v203 = vld [vmem:[#allocation6 + $0x20] sm:$0xf]
    %v204 = vld [vmem:[#allocation6 + $0x24] sm:$0xf]
    %v205 = vld [vmem:[#allocation6 + $0x28] sm:$0xf]
    %v206 = vld [vmem:[#allocation6 + $0x2c] sm:$0xf]
    %v207 = vld [vmem:[#allocation6 + $0x30] sm:$0xf]
    %v208 = vld [vmem:[#allocation6 + $0x34] sm:$0xf]
    %v209 = vld [vmem:[#allocation6 + $0x38] sm:$0xf]
    %v210 = vld [vmem:[#allocation6 + $0x3c] sm:$0xf]
    %v211 = vld [vmem:[#allocation6 + $0x40] sm:$0xf]
    %v212 = vld [vmem:[#allocation6 + $0x44] sm:$0xf]
    %v213 = vld [vmem:[#allocation6 + $0x48] sm:$0xf]
    %v214 = vld [vmem:[#allocation6 + $0x4c] sm:$0xf]
    %v215 = vld [vmem:[#allocation6 + $0x50] sm:$0xf]
    %v216 = vld [vmem:[#allocation6 + $0x54] sm:$0xf]
    %v217 = vld [vmem:[#allocation6 + $0x58] sm:$0xf]
    %v218 = vld [vmem:[#allocation6 + $0x5c] sm:$0xf]
    %v219 = vld [vmem:[#allocation6 + $0x60] sm:$0xf]
    %v220 = vld [vmem:[#allocation6 + $0x64] sm:$0xf]
    %v221 = vld [vmem:[#allocation6 + $0x68] sm:$0xf]
    %v222 = vld [vmem:[#allocation6 + $0x6c] sm:$0xf]
    %v223 = vld [vmem:[#allocation6 + $0x70] sm:$0xf]
    %v224 = vld [vmem:[#allocation6 + $0x74] sm:$0xf]
    %v225 = vld [vmem:[#allocation6 + $0x78] sm:$0xf]
    %v226 = vld [vmem:[#allocation6 + $0x7c] sm:$0xf]
    %v229 = vunpack.c.l.b16 %v193
    %v230 = vunpack.c.h.b16 %v193
    %v231 = vunpack.c.l.b16 %v194
    %v232 = vunpack.c.h.b16 %v194
    %v233 = vpack.c.b16 %v231, %v229
    %v234 = vpack.c.b16 %v232, %v230
    %v269 = vunpack.c.l.b16 %v195
    %v270 = vunpack.c.l.b16 %v196
    %v271 = vunpack.c.l.b16 %v197
    %v272 = vunpack.c.l.b16 %v198
    %v273 = vunpack.c.l.b16 %v199
    %v274 = vunpack.c.l.b16 %v200
    %v275 = vunpack.c.l.b16 %v201
    %v276 = vunpack.c.l.b16 %v202
    %v277 = vunpack.c.l.b16 %v203
    %v278 = vunpack.c.l.b16 %v204
    %v279 = vunpack.c.l.b16 %v205
    %v280 = vunpack.c.l.b16 %v206
    %v281 = vunpack.c.l.b16 %v207
    %v282 = vunpack.c.l.b16 %v208
    %v283 = vunpack.c.l.b16 %v209
    %v284 = vunpack.c.l.b16 %v210
    %v285 = vunpack.c.l.b16 %v211
    %v286 = vunpack.c.l.b16 %v212
    %v287 = vunpack.c.l.b16 %v213
    %v288 = vunpack.c.l.b16 %v214
    %v289 = vunpack.c.l.b16 %v215
    %v290 = vunpack.c.l.b16 %v216
    %v291 = vunpack.c.l.b16 %v217
    %v292 = vunpack.c.l.b16 %v218
    %v293 = vunpack.c.l.b16 %v219
    %v294 = vunpack.c.l.b16 %v220
    %v295 = vunpack.c.l.b16 %v221
    %v296 = vunpack.c.l.b16 %v222
    %v297 = vunpack.c.l.b16 %v223
    %v298 = vunpack.c.l.b16 %v224
    %v299 = vunpack.c.l.b16 %v225
    %v300 = vunpack.c.l.b16 %v226
    %v301 = vpack.c.b16 %v270, %v269
    %v302 = vpack.c.b16 %v272, %v271
    %v303 = vpack.c.b16 %v274, %v273
    %v304 = vpack.c.b16 %v276, %v275
    %v305 = vpack.c.b16 %v278, %v277
    %v306 = vpack.c.b16 %v280, %v279
    %v307 = vpack.c.b16 %v282, %v281
    %v308 = vpack.c.b16 %v284, %v283
    %v309 = vpack.c.b16 %v286, %v285
    %v310 = vpack.c.b16 %v288, %v287
    %v311 = vpack.c.b16 %v290, %v289
    %v312 = vpack.c.b16 %v292, %v291
    %v313 = vpack.c.b16 %v294, %v293
    %v314 = vpack.c.b16 %v296, %v295
    %v315 = vpack.c.b16 %v298, %v297
    %v316 = vpack.c.b16 %v300, %v299
    %333 = vmatprep.subr.bf16.mxu0 0
    %334 = vmatpush1.bf16.msra.mxu0 %v301
    %335 = vmatprep.subr.bf16.mxu0 0
    %336 = vmatpush1.bf16.msra.mxu0 %v302
    %337 = vmatprep.subr.bf16.mxu0 0
    %338 = vmatpush1.bf16.msra.mxu0 %v303
    %339 = vmatprep.subr.bf16.mxu0 0
    %340 = vmatpush1.bf16.msra.mxu0 %v304
    %341 = vmatprep.subr.bf16.mxu0 0
    %342 = vmatpush1.bf16.msra.mxu0 %v305
    %343 = vmatprep.subr.bf16.mxu0 0
    %344 = vmatpush1.bf16.msra.mxu0 %v306
    %345 = vmatprep.subr.bf16.mxu0 0
    %346 = vmatpush1.bf16.msra.mxu0 %v307
    %347 = vmatprep.subr.bf16.mxu0 0
    %348 = vmatpush1.bf16.msra.mxu0 %v308
    %349 = vmatprep.subr.bf16.mxu0 0
    %350 = vmatpush1.bf16.msra.mxu0 %v309
    %351 = vmatprep.subr.bf16.mxu0 0
    %352 = vmatpush1.bf16.msra.mxu0 %v310
    %353 = vmatprep.subr.bf16.mxu0 0
    %354 = vmatpush1.bf16.msra.mxu0 %v311
    %355 = vmatprep.subr.bf16.mxu0 0
    %356 = vmatpush1.bf16.msra.mxu0 %v312
    %357 = vmatprep.subr.bf16.mxu0 0
    %358 = vmatpush1.bf16.msra.mxu0 %v313
    %359 = vmatprep.subr.bf16.mxu0 0
    %360 = vmatpush1.bf16.msra.mxu0 %v314
    %361 = vmatprep.subr.bf16.mxu0 0
    %362 = vmatpush1.bf16.msra.mxu0 %v315
    %363 = vmatprep.subr.bf16.mxu0 0
    %364 = vmatpush1.bf16.msra.mxu0 %v316
    %365 = vmatprep.mubr.bf16.mxu0 %v234
    %366 = vmatmul.mubr.bf16.gmra.mrb[0].mxu0 %v233
    %v367 = vpop.f32.mrb[0].mxu0
    %v368 = vadd.f32 0.0, %v367
    %v369 = vpop.f32.mrb[0].mxu0
    %v370 = vpop.f32.mrb[0].mxu0
    %v371 = vadd.f32 0.0, %v370
    %v372 = vpop.f32.mrb[0].mxu0
    %373 = vdwg.mxu0
    %v374 = vadd.f32 %v191, %v368
    %v375 = vadd.f32 %v192, %v371
    %376 = vst [vmem:[#allocation2] sm:$0xff] %v374
    %377 = vst [vmem:[#allocation2 + $0x8] sm:$0xff] %v375
    %v378 = vld [vmem:[#allocation3] sm:$0xff]
    %v379 = vld [vmem:[#allocation3 + $0x8] sm:$0xff]
    %v380 = vld [vmem:[%s1] sm:$0xff]
    %v381 = vld [vmem:[%s1 + $0x8] sm:$0xff]
    %v382 = vld [vmem:[%s1 + $0x10] sm:$0xff]
    %v383 = vld [vmem:[%s1 + $0x18] sm:$0xff]
    %v384 = vld [vmem:[%s1 + $0x20] sm:$0xff]
    %v385 = vld [vmem:[%s1 + $0x28] sm:$0xff]
    %v386 = vld [vmem:[#allocation8] sm:$0xf]
    %v387 = vld [vmem:[#allocation8 + $0x4] sm:$0xf]
    %v388 = vld [vmem:[#allocation8 + $0x8] sm:$0xf]
    %v389 = vld [vmem:[#allocation8 + $0xc] sm:$0xf]
    %v390 = vld [vmem:[#allocation8 + $0x10] sm:$0xf]
    %v391 = vld [vmem:[#allocation8 + $0x14] sm:$0xf]
    %v392 = vld [vmem:[#allocation8 + $0x18] sm:$0xf]
    %v393 = vld [vmem:[#allocation8 + $0x1c] sm:$0xf]
    %v394 = vld [vmem:[#allocation8 + $0x20] sm:$0xf]
    %v395 = vld [vmem:[#allocation8 + $0x24] sm:$0xf]
    %v396 = vld [vmem:[#allocation8 + $0x28] sm:$0xf]
    %v397 = vld [vmem:[#allocation8 + $0x2c] sm:$0xf]
    %v398 = vld [vmem:[#allocation8 + $0x30] sm:$0xf]
    %v399 = vld [vmem:[#allocation8 + $0x34] sm:$0xf]
    %v400 = vld [vmem:[#allocation8 + $0x38] sm:$0xf]
    %v401 = vld [vmem:[#allocation8 + $0x3c] sm:$0xf]
    %v402 = vld [vmem:[#allocation8 + $0x40] sm:$0xf]
    %v403 = vld [vmem:[#allocation8 + $0x44] sm:$0xf]
    %v404 = vld [vmem:[#allocation8 + $0x48] sm:$0xf]
    %v405 = vld [vmem:[#allocation8 + $0x4c] sm:$0xf]
    %v406 = vld [vmem:[#allocation8 + $0x50] sm:$0xf]
    %v407 = vld [vmem:[#allocation8 + $0x54] sm:$0xf]
    %v408 = vld [vmem:[#allocation8 + $0x58] sm:$0xf]
    %v409 = vld [vmem:[#allocation8 + $0x5c] sm:$0xf]
    %v410 = vld [vmem:[#allocation8 + $0x60] sm:$0xf]
    %v411 = vld [vmem:[#allocation8 + $0x64] sm:$0xf]
    %v412 = vld [vmem:[#allocation8 + $0x68] sm:$0xf]
    %v413 = vld [vmem:[#allocation8 + $0x6c] sm:$0xf]
    %v414 = vld [vmem:[#allocation8 + $0x70] sm:$0xf]
    %v415 = vld [vmem:[#allocation8 + $0x74] sm:$0xf]
    %v416 = vld [vmem:[#allocation8 + $0x78] sm:$0xf]
    %v417 = vld [vmem:[#allocation8 + $0x7c] sm:$0xf]
    %v418 = vld [vmem:[#allocation8 + $0x80] sm:$0xf]
    %v419 = vld [vmem:[#allocation8 + $0x84] sm:$0xf]
    %v420 = vld [vmem:[#allocation8 + $0x88] sm:$0xf]
    %v421 = vld [vmem:[#allocation8 + $0x8c] sm:$0xf]
    %v422 = vld [vmem:[#allocation8 + $0x90] sm:$0xf]
    %v423 = vld [vmem:[#allocation8 + $0x94] sm:$0xf]
    %v424 = vld [vmem:[#allocation8 + $0x98] sm:$0xf]
    %v425 = vld [vmem:[#allocation8 + $0x9c] sm:$0xf]
    %v426 = vld [vmem:[#allocation8 + $0xa0] sm:$0xf]
    %v427 = vld [vmem:[#allocation8 + $0xa4] sm:$0xf]
    %v428 = vld [vmem:[#allocation8 + $0xa8] sm:$0xf]
    %v429 = vld [vmem:[#allocation8 + $0xac] sm:$0xf]
    %v430 = vld [vmem:[#allocation8 + $0xb0] sm:$0xf]
    %v431 = vld [vmem:[#allocation8 + $0xb4] sm:$0xf]
    %v432 = vld [vmem:[#allocation8 + $0xb8] sm:$0xf]
    %v433 = vld [vmem:[#allocation8 + $0xbc] sm:$0xf]
    %v434 = vld [vmem:[#allocation8 + $0xc0] sm:$0xf]
    %v435 = vld [vmem:[#allocation8 + $0xc4] sm:$0xf]
    %v436 = vld [vmem:[#allocation8 + $0xc8] sm:$0xf]
    %v437 = vld [vmem:[#allocation8 + $0xcc] sm:$0xf]
    %v438 = vld [vmem:[#allocation8 + $0xd0] sm:$0xf]
    %v439 = vld [vmem:[#allocation8 + $0xd4] sm:$0xf]
    %v440 = vld [vmem:[#allocation8 + $0xd8] sm:$0xf]
    %v441 = vld [vmem:[#allocation8 + $0xdc] sm:$0xf]
    %v442 = vld [vmem:[#allocation8 + $0xe0] sm:$0xf]
    %v443 = vld [vmem:[#allocation8 + $0xe4] sm:$0xf]
    %v444 = vld [vmem:[#allocation8 + $0xe8] sm:$0xf]
    %v445 = vld [vmem:[#allocation8 + $0xec] sm:$0xf]
    %v446 = vld [vmem:[#allocation8 + $0xf0] sm:$0xf]
    %v447 = vld [vmem:[#allocation8 + $0xf4] sm:$0xf]
    %v448 = vld [vmem:[#allocation8 + $0xf8] sm:$0xf]
    %v449 = vld [vmem:[#allocation8 + $0xfc] sm:$0xf]
    %v450 = vld [vmem:[#allocation8 + $0x100] sm:$0xf]
    %v451 = vld [vmem:[#allocation8 + $0x104] sm:$0xf]
    %v452 = vld [vmem:[#allocation8 + $0x108] sm:$0xf]
    %v453 = vld [vmem:[#allocation8 + $0x10c] sm:$0xf]
    %v454 = vld [vmem:[#allocation8 + $0x110] sm:$0xf]
    %v455 = vld [vmem:[#allocation8 + $0x114] sm:$0xf]
    %v456 = vld [vmem:[#allocation8 + $0x118] sm:$0xf]
    %v457 = vld [vmem:[#allocation8 + $0x11c] sm:$0xf]
    %v458 = vld [vmem:[#allocation8 + $0x120] sm:$0xf]
    %v459 = vld [vmem:[#allocation8 + $0x124] sm:$0xf]
    %v460 = vld [vmem:[#allocation8 + $0x128] sm:$0xf]
    %v461 = vld [vmem:[#allocation8 + $0x12c] sm:$0xf]
    %v462 = vld [vmem:[#allocation8 + $0x130] sm:$0xf]
    %v463 = vld [vmem:[#allocation8 + $0x134] sm:$0xf]
    %v464 = vld [vmem:[#allocation8 + $0x138] sm:$0xf]
    %v465 = vld [vmem:[#allocation8 + $0x13c] sm:$0xf]
    %v466 = vld [vmem:[#allocation8 + $0x140] sm:$0xf]
    %v467 = vld [vmem:[#allocation8 + $0x144] sm:$0xf]
    %v468 = vld [vmem:[#allocation8 + $0x148] sm:$0xf]
    %v469 = vld [vmem:[#allocation8 + $0x14c] sm:$0xf]
    %v470 = vld [vmem:[#allocation8 + $0x150] sm:$0xf]
    %v471 = vld [vmem:[#allocation8 + $0x154] sm:$0xf]
    %v472 = vld [vmem:[#allocation8 + $0x158] sm:$0xf]
    %v473 = vld [vmem:[#allocation8 + $0x15c] sm:$0xf]
    %v474 = vld [vmem:[#allocation8 + $0x160] sm:$0xf]
    %v475 = vld [vmem:[#allocation8 + $0x164] sm:$0xf]
    %v476 = vld [vmem:[#allocation8 + $0x168] sm:$0xf]
    %v477 = vld [vmem:[#allocation8 + $0x16c] sm:$0xf]
    %v478 = vld [vmem:[#allocation8 + $0x170] sm:$0xf]
    %v479 = vld [vmem:[#allocation8 + $0x174] sm:$0xf]
    %v480 = vld [vmem:[#allocation8 + $0x178] sm:$0xf]
    %v481 = vld [vmem:[#allocation8 + $0x17c] sm:$0xf]
    %v488 = vunpack.c.l.b16 %v380
    %v489 = vunpack.c.h.b16 %v380
    %v490 = vunpack.c.l.b16 %v381
    %v491 = vunpack.c.h.b16 %v381
    %v492 = vunpack.c.l.b16 %v382
    %v493 = vunpack.c.h.b16 %v382
    %v494 = vunpack.c.l.b16 %v383
    %v495 = vunpack.c.h.b16 %v383
    %v496 = vunpack.c.l.b16 %v384
    %v497 = vunpack.c.h.b16 %v384
    %v498 = vunpack.c.l.b16 %v385
    %v499 = vunpack.c.h.b16 %v385
    %v500 = vpack.c.b16 %v494, %v488
    %v501 = vpack.c.b16 %v495, %v489
    %v502 = vpack.c.b16 %v496, %v490
    %v503 = vpack.c.b16 %v497, %v491
    %v504 = vpack.c.b16 %v498, %v492
    %v505 = vpack.c.b16 %v499, %v493
    %v608 = vunpack.c.l.b16 %v386
    %v609 = vunpack.c.l.b16 %v387
    %v610 = vunpack.c.l.b16 %v388
    %v611 = vunpack.c.l.b16 %v389
    %v612 = vunpack.c.l.b16 %v390
    %v613 = vunpack.c.l.b16 %v391
    %v614 = vunpack.c.l.b16 %v392
    %v615 = vunpack.c.l.b16 %v393
    %v616 = vunpack.c.l.b16 %v394
    %v617 = vunpack.c.l.b16 %v395
    %v618 = vunpack.c.l.b16 %v396
    %v619 = vunpack.c.l.b16 %v397
    %v620 = vunpack.c.l.b16 %v398
    %v621 = vunpack.c.l.b16 %v399
    %v622 = vunpack.c.l.b16 %v400
    %v623 = vunpack.c.l.b16 %v401
    %v624 = vunpack.c.l.b16 %v402
    %v625 = vunpack.c.l.b16 %v403
    %v626 = vunpack.c.l.b16 %v404
    %v627 = vunpack.c.l.b16 %v405
    %v628 = vunpack.c.l.b16 %v406
    %v629 = vunpack.c.l.b16 %v407
    %v630 = vunpack.c.l.b16 %v408
    %v631 = vunpack.c.l.b16 %v409
    %v632 = vunpack.c.l.b16 %v410
    %v633 = vunpack.c.l.b16 %v411
    %v634 = vunpack.c.l.b16 %v412
    %v635 = vunpack.c.l.b16 %v413
    %v636 = vunpack.c.l.b16 %v414
    %v637 = vunpack.c.l.b16 %v415
    %v638 = vunpack.c.l.b16 %v416
    %v639 = vunpack.c.l.b16 %v417
    %v640 = vunpack.c.l.b16 %v418
    %v641 = vunpack.c.l.b16 %v419
    %v642 = vunpack.c.l.b16 %v420
    %v643 = vunpack.c.l.b16 %v421
    %v644 = vunpack.c.l.b16 %v422
    %v645 = vunpack.c.l.b16 %v423
    %v646 = vunpack.c.l.b16 %v424
    %v647 = vunpack.c.l.b16 %v425
    %v648 = vunpack.c.l.b16 %v426
    %v649 = vunpack.c.l.b16 %v427
    %v650 = vunpack.c.l.b16 %v428
    %v651 = vunpack.c.l.b16 %v429
    %v652 = vunpack.c.l.b16 %v430
    %v653 = vunpack.c.l.b16 %v431
    %v654 = vunpack.c.l.b16 %v432
    %v655 = vunpack.c.l.b16 %v433
    %v656 = vunpack.c.l.b16 %v434
    %v657 = vunpack.c.l.b16 %v435
    %v658 = vunpack.c.l.b16 %v436
    %v659 = vunpack.c.l.b16 %v437
    %v660 = vunpack.c.l.b16 %v438
    %v661 = vunpack.c.l.b16 %v439
    %v662 = vunpack.c.l.b16 %v440
    %v663 = vunpack.c.l.b16 %v441
    %v664 = vunpack.c.l.b16 %v442
    %v665 = vunpack.c.l.b16 %v443
    %v666 = vunpack.c.l.b16 %v444
    %v667 = vunpack.c.l.b16 %v445
    %v668 = vunpack.c.l.b16 %v446
    %v669 = vunpack.c.l.b16 %v447
    %v670 = vunpack.c.l.b16 %v448
    %v671 = vunpack.c.l.b16 %v449
    %v672 = vunpack.c.l.b16 %v450
    %v673 = vunpack.c.l.b16 %v451
    %v674 = vunpack.c.l.b16 %v452
    %v675 = vunpack.c.l.b16 %v453
    %v676 = vunpack.c.l.b16 %v454
    %v677 = vunpack.c.l.b16 %v455
    %v678 = vunpack.c.l.b16 %v456
    %v679 = vunpack.c.l.b16 %v457
    %v680 = vunpack.c.l.b16 %v458
    %v681 = vunpack.c.l.b16 %v459
    %v682 = vunpack.c.l.b16 %v460
    %v683 = vunpack.c.l.b16 %v461
    %v684 = vunpack.c.l.b16 %v462
    %v685 = vunpack.c.l.b16 %v463
    %v686 = vunpack.c.l.b16 %v464
    %v687 = vunpack.c.l.b16 %v465
    %v688 = vunpack.c.l.b16 %v466
    %v689 = vunpack.c.l.b16 %v467
    %v690 = vunpack.c.l.b16 %v468
    %v691 = vunpack.c.l.b16 %v469
    %v692 = vunpack.c.l.b16 %v470
    %v693 = vunpack.c.l.b16 %v471
    %v694 = vunpack.c.l.b16 %v472
    %v695 = vunpack.c.l.b16 %v473
    %v696 = vunpack.c.l.b16 %v474
    %v697 = vunpack.c.l.b16 %v475
    %v698 = vunpack.c.l.b16 %v476
    %v699 = vunpack.c.l.b16 %v477
    %v700 = vunpack.c.l.b16 %v478
    %v701 = vunpack.c.l.b16 %v479
    %v702 = vunpack.c.l.b16 %v480
    %v703 = vunpack.c.l.b16 %v481
    %v704 = vpack.c.b16 %v609, %v608
    %v705 = vpack.c.b16 %v611, %v610
    %v706 = vpack.c.b16 %v613, %v612
    %v707 = vpack.c.b16 %v615, %v614
    %v708 = vpack.c.b16 %v617, %v616
    %v709 = vpack.c.b16 %v619, %v618
    %v710 = vpack.c.b16 %v621, %v620
    %v711 = vpack.c.b16 %v623, %v622
    %v712 = vpack.c.b16 %v625, %v624
    %v713 = vpack.c.b16 %v627, %v626
    %v714 = vpack.c.b16 %v629, %v628
    %v715 = vpack.c.b16 %v631, %v630
    %v716 = vpack.c.b16 %v633, %v632
    %v717 = vpack.c.b16 %v635, %v634
    %v718 = vpack.c.b16 %v637, %v636
    %v719 = vpack.c.b16 %v639, %v638
    %v720 = vpack.c.b16 %v641, %v640
    %v721 = vpack.c.b16 %v643, %v642
    %v722 = vpack.c.b16 %v645, %v644
    %v723 = vpack.c.b16 %v647, %v646
    %v724 = vpack.c.b16 %v649, %v648
    %v725 = vpack.c.b16 %v651, %v650
    %v726 = vpack.c.b16 %v653, %v652
    %v727 = vpack.c.b16 %v655, %v654
    %v728 = vpack.c.b16 %v657, %v656
    %v729 = vpack.c.b16 %v659, %v658
    %v730 = vpack.c.b16 %v661, %v660
    %v731 = vpack.c.b16 %v663, %v662
    %v732 = vpack.c.b16 %v665, %v664
    %v733 = vpack.c.b16 %v667, %v666
    %v734 = vpack.c.b16 %v669, %v668
    %v735 = vpack.c.b16 %v671, %v670
    %v736 = vpack.c.b16 %v673, %v672
    %v737 = vpack.c.b16 %v675, %v674
    %v738 = vpack.c.b16 %v677, %v676
    %v739 = vpack.c.b16 %v679, %v678
    %v740 = vpack.c.b16 %v681, %v680
    %v741 = vpack.c.b16 %v683, %v682
    %v742 = vpack.c.b16 %v685, %v684
    %v743 = vpack.c.b16 %v687, %v686
    %v744 = vpack.c.b16 %v689, %v688
    %v745 = vpack.c.b16 %v691, %v690
    %v746 = vpack.c.b16 %v693, %v692
    %v747 = vpack.c.b16 %v695, %v694
    %v748 = vpack.c.b16 %v697, %v696
    %v749 = vpack.c.b16 %v699, %v698
    %v750 = vpack.c.b16 %v701, %v700
    %v751 = vpack.c.b16 %v703, %v702
    %800 = vmatprep.subr.bf16.mxu0 0
    %801 = vmatpush1.bf16.msra.mxu0 %v704
    %802 = vmatprep.subr.bf16.mxu0 0
    %803 = vmatpush1.bf16.msra.mxu0 %v705
    %804 = vmatprep.subr.bf16.mxu0 0
    %805 = vmatpush1.bf16.msra.mxu0 %v706
    %806 = vmatprep.subr.bf16.mxu0 0
    %807 = vmatpush1.bf16.msra.mxu0 %v707
    %808 = vmatprep.subr.bf16.mxu0 0
    %809 = vmatpush1.bf16.msra.mxu0 %v708
    %810 = vmatprep.subr.bf16.mxu0 0
    %811 = vmatpush1.bf16.msra.mxu0 %v709
    %812 = vmatprep.subr.bf16.mxu0 0
    %813 = vmatpush1.bf16.msra.mxu0 %v710
    %814 = vmatprep.subr.bf16.mxu0 0
    %815 = vmatpush1.bf16.msra.mxu0 %v711
    %816 = vmatprep.subr.bf16.mxu0 0
    %817 = vmatpush1.bf16.msra.mxu0 %v712
    %818 = vmatprep.subr.bf16.mxu0 0
    %819 = vmatpush1.bf16.msra.mxu0 %v713
    %820 = vmatprep.subr.bf16.mxu0 0
    %821 = vmatpush1.bf16.msra.mxu0 %v714
    %822 = vmatprep.subr.bf16.mxu0 0
    %823 = vmatpush1.bf16.msra.mxu0 %v715
    %824 = vmatprep.subr.bf16.mxu0 0
    %825 = vmatpush1.bf16.msra.mxu0 %v716
    %826 = vmatprep.subr.bf16.mxu0 0
    %827 = vmatpush1.bf16.msra.mxu0 %v717
    %828 = vmatprep.subr.bf16.mxu0 0
    %829 = vmatpush1.bf16.msra.mxu0 %v718
    %830 = vmatprep.subr.bf16.mxu0 0
    %831 = vmatpush1.bf16.msra.mxu0 %v719
    %832 = vmatprep.mubr.bf16.mxu0 %v501
    %833 = vmatmul.mubr.bf16.gmra.mrb[0].mxu0 %v500
    %v834 = vpop.f32.mrb[0].mxu0
    %v835 = vadd.f32 0.0, %v834
    %v836 = vpop.f32.mrb[0].mxu0
    %v837 = vpop.f32.mrb[0].mxu0
    %v838 = vadd.f32 0.0, %v837
    %v839 = vpop.f32.mrb[0].mxu0
    %840 = vdwg.mxu0
    %841 = vmatprep.subr.bf16.mxu0 0
    %842 = vmatpush1.bf16.msra.mxu0 %v720
    %843 = vmatprep.subr.bf16.mxu0 0
    %844 = vmatpush1.bf16.msra.mxu0 %v721
    %845 = vmatprep.subr.bf16.mxu0 0
    %846 = vmatpush1.bf16.msra.mxu0 %v722
    %847 = vmatprep.subr.bf16.mxu0 0
    %848 = vmatpush1.bf16.msra.mxu0 %v723
    %849 = vmatprep.subr.bf16.mxu0 0
    %850 = vmatpush1.bf16.msra.mxu0 %v724
    %851 = vmatprep.subr.bf16.mxu0 0
    %852 = vmatpush1.bf16.msra.mxu0 %v725
    %853 = vmatprep.subr.bf16.mxu0 0
    %854 = vmatpush1.bf16.msra.mxu0 %v726
    %855 = vmatprep.subr.bf16.mxu0 0
    %856 = vmatpush1.bf16.msra.mxu0 %v727
    %857 = vmatprep.subr.bf16.mxu0 0
    %858 = vmatpush1.bf16.msra.mxu0 %v728
    %859 = vmatprep.subr.bf16.mxu0 0
    %860 = vmatpush1.bf16.msra.mxu0 %v729
    %861 = vmatprep.subr.bf16.mxu0 0
    %862 = vmatpush1.bf16.msra.mxu0 %v730
    %863 = vmatprep.subr.bf16.mxu0 0
    %864 = vmatpush1.bf16.msra.mxu0 %v731
    %865 = vmatprep.subr.bf16.mxu0 0
    %866 = vmatpush1.bf16.msra.mxu0 %v732
    %867 = vmatprep.subr.bf16.mxu0 0
    %868 = vmatpush1.bf16.msra.mxu0 %v733
    %869 = vmatprep.subr.bf16.mxu0 0
    %870 = vmatpush1.bf16.msra.mxu0 %v734
    %871 = vmatprep.subr.bf16.mxu0 0
    %872 = vmatpush1.bf16.msra.mxu0 %v735
    %873 = vmatprep.mubr.bf16.mxu0 %v503
    %874 = vmatmul.mubr.bf16.gmra.mrb[0].mxu0 %v502
    %v875 = vpop.f32.mrb[0].mxu0
    %v876 = vadd.f32 %v835, %v875
    %v877 = vpop.f32.mrb[0].mxu0
    %v878 = vpop.f32.mrb[0].mxu0
    %v879 = vadd.f32 %v838, %v878
    %v880 = vpop.f32.mrb[0].mxu0
    %881 = vdwg.mxu0
    %882 = vmatprep.subr.bf16.mxu0 0
    %883 = vmatpush1.bf16.msra.mxu0 %v736
    %884 = vmatprep.subr.bf16.mxu0 0
    %885 = vmatpush1.bf16.msra.mxu0 %v737
    %886 = vmatprep.subr.bf16.mxu0 0
    %887 = vmatpush1.bf16.msra.mxu0 %v738
    %888 = vmatprep.subr.bf16.mxu0 0
    %889 = vmatpush1.bf16.msra.mxu0 %v739
    %890 = vmatprep.subr.bf16.mxu0 0
    %891 = vmatpush1.bf16.msra.mxu0 %v740
    %892 = vmatprep.subr.bf16.mxu0 0
    %893 = vmatpush1.bf16.msra.mxu0 %v741
    %894 = vmatprep.subr.bf16.mxu0 0
    %895 = vmatpush1.bf16.msra.mxu0 %v742
    %896 = vmatprep.subr.bf16.mxu0 0
    %897 = vmatpush1.bf16.msra.mxu0 %v743
    %898 = vmatprep.subr.bf16.mxu0 0
    %899 = vmatpush1.bf16.msra.mxu0 %v744
    %900 = vmatprep.subr.bf16.mxu0 0
    %901 = vmatpush1.bf16.msra.mxu0 %v745
    %902 = vmatprep.subr.bf16.mxu0 0
    %903 = vmatpush1.bf16.msra.mxu0 %v746
    %904 = vmatprep.subr.bf16.mxu0 0
    %905 = vmatpush1.bf16.msra.mxu0 %v747
    %906 = vmatprep.subr.bf16.mxu0 0
    %907 = vmatpush1.bf16.msra.mxu0 %v748
    %908 = vmatprep.subr.bf16.mxu0 0
    %909 = vmatpush1.bf16.msra.mxu0 %v749
    %910 = vmatprep.subr.bf16.mxu0 0
    %911 = vmatpush1.bf16.msra.mxu0 %v750
    %912 = vmatprep.subr.bf16.mxu0 0
    %913 = vmatpush1.bf16.msra.mxu0 %v751
    %914 = vmatprep.mubr.bf16.mxu0 %v505
    %915 = vmatmul.mubr.bf16.gmra.mrb[0].mxu0 %v504
    %v916 = vpop.f32.mrb[0].mxu0
    %v917 = vadd.f32 %v876, %v916
    %v918 = vpop.f32.mrb[0].mxu0
    %v919 = vpop.f32.mrb[0].mxu0
    %v920 = vadd.f32 %v879, %v919
    %v921 = vpop.f32.mrb[0].mxu0
    %922 = vdwg.mxu0
    %v923 = vadd.f32 %v378, %v917
    %v924 = vadd.f32 %v379, %v920
    %925 = vst [vmem:[#allocation3] sm:$0xff] %v923
    %926 = vst [vmem:[#allocation3 + $0x8] sm:$0xff] %v924
    // Predicated region
    $region98: #{avfdti_forward.1} parent=1 // pred_check
      %p927 = pneg %p183
    $region99: #{avfdti_forward.1} parent=1 // pred_check_branch
      %929 = sbr.rel (%p927) target = $region101
    $region100: #{avfdti_forward.1} parent=1 // pred_region
      %v930 = vld [vmem:[#allocation2] sm:$0xff]
      %v931 = vld [vmem:[#allocation2 + $0x8] sm:$0xff]
      %v932 = vld [vmem:[#allocation4] ss:$0 sm:$0xff]
      %v933 = vadd.f32 %v930, %v932
      %v934 = vadd.f32 %v931, %v932
      %v935 = vmax.f32 %v933, 0.0
      %v936 = vmax.f32 %v934, 0.0
      %v937 = vld [vmem:[#allocation3] sm:$0xff]
      %v938 = vld [vmem:[#allocation3 + $0x8] sm:$0xff]
      %v939 = vld [vmem:[#allocation4 + $0x1] ss:$0 sm:$0xff]
      %v940 = vadd.f32 %v937, %v939
      %v941 = vadd.f32 %v938, %v939
      %v942 = vmax.f32 %v940, 0.0
      %v943 = vmax.f32 %v941, 0.0
      %v944 = vpack.c.bf16 %v943, %v942
      %v945 = vld [vmem:[#allocation9] sm:$0xff]
      %v946 = vld [vmem:[#allocation9 + $0x8] sm:$0xff]
      %v947 = vld [vmem:[#allocation9 + $0x10] sm:$0xff]
      %v948 = vld [vmem:[#allocation9 + $0x18] sm:$0xff]
      %v949 = vld [vmem:[#allocation9 + $0x20] sm:$0xff]
      %v950 = vld [vmem:[#allocation9 + $0x28] sm:$0xff]
      %v951 = vld [vmem:[#allocation9 + $0x30] sm:$0xff]
      %v952 = vld [vmem:[#allocation9 + $0x38] sm:$0xff]
      %v953 = vld [vmem:[#allocation9 + $0x40] sm:$0xff]
      %v954 = vld [vmem:[#allocation9 + $0x48] sm:$0xff]
      %v955 = vld [vmem:[#allocation9 + $0x50] sm:$0xff]
      %v956 = vld [vmem:[#allocation9 + $0x58] sm:$0xff]
      %v957 = vld [vmem:[#allocation9 + $0x60] sm:$0xff]
      %v958 = vld [vmem:[#allocation9 + $0x68] sm:$0xff]
      %v959 = vld [vmem:[#allocation9 + $0x70] sm:$0xff]
      %v960 = vld [vmem:[#allocation9 + $0x78] sm:$0xff]
      %s961 = scalar_lea.vmem [#allocation4], 2
      %v962 = vld [vmem:[%s961] ss:$8 sm:$0x3]
      %v964 = vlaneseq
      %v965 = vshrl.u32 %v964, 7
      %v966 = vsub.s32 0, %v965
      %v967 = vrot.slane %v962, %v966
      %v968 = vlaneseq
      %v969 = vshrl.u32 %v968, 7
      %v970 = vsub.s32 1, %v969
      %v971 = vrot.slane %v962, %v970
      %v990 = vunpack.c.l.b16 %v945
      %v991 = vunpack.c.h.b16 %v945
      %v992 = vunpack.c.l.b16 %v946
      %v993 = vunpack.c.h.b16 %v946
      %v994 = vunpack.c.l.b16 %v947
      %v995 = vunpack.c.h.b16 %v947
      %v996 = vunpack.c.l.b16 %v948
      %v997 = vunpack.c.h.b16 %v948
      %v998 = vunpack.c.l.b16 %v949
      %v999 = vunpack.c.h.b16 %v949
      %v1000 = vunpack.c.l.b16 %v950
      %v1001 = vunpack.c.h.b16 %v950
      %v1002 = vunpack.c.l.b16 %v951
      %v1003 = vunpack.c.h.b16 %v951
      %v1004 = vunpack.c.l.b16 %v952
      %v1005 = vunpack.c.h.b16 %v952
      %v1006 = vunpack.c.l.b16 %v953
      %v1007 = vunpack.c.h.b16 %v953
      %v1008 = vunpack.c.l.b16 %v954
      %v1009 = vunpack.c.h.b16 %v954
      %v1010 = vunpack.c.l.b16 %v955
      %v1011 = vunpack.c.h.b16 %v955
      %v1012 = vunpack.c.l.b16 %v956
      %v1013 = vunpack.c.h.b16 %v956
      %v1014 = vunpack.c.l.b16 %v957
      %v1015 = vunpack.c.h.b16 %v957
      %v1016 = vunpack.c.l.b16 %v958
      %v1017 = vunpack.c.h.b16 %v958
      %v1018 = vunpack.c.l.b16 %v959
      %v1019 = vunpack.c.h.b16 %v959
      %v1020 = vunpack.c.l.b16 %v960
      %v1021 = vunpack.c.h.b16 %v960
      %v1022 = vpack.c.b16 %v992, %v990
      %v1023 = vpack.c.b16 %v993, %v991
      %v1024 = vpack.c.b16 %v996, %v994
      %v1025 = vpack.c.b16 %v997, %v995
      %v1026 = vpack.c.b16 %v1000, %v998
      %v1027 = vpack.c.b16 %v1001, %v999
      %v1028 = vpack.c.b16 %v1004, %v1002
      %v1029 = vpack.c.b16 %v1005, %v1003
      %v1030 = vpack.c.b16 %v1008, %v1006
      %v1031 = vpack.c.b16 %v1009, %v1007
      %v1032 = vpack.c.b16 %v1012, %v1010
      %v1033 = vpack.c.b16 %v1013, %v1011
      %v1034 = vpack.c.b16 %v1016, %v1014
      %v1035 = vpack.c.b16 %v1017, %v1015
      %v1036 = vpack.c.b16 %v1020, %v1018
      %v1037 = vpack.c.b16 %v1021, %v1019
      %1054 = vmatprep.subr.bf16.mxu0 %v1023
      %1055 = vmatpush1.bf16.msra.mxu0 %v1022
      %1056 = vmatprep.subr.bf16.mxu0 %v1025
      %1057 = vmatpush1.bf16.msra.mxu0 %v1024
      %1058 = vmatprep.subr.bf16.mxu0 %v1027
      %1059 = vmatpush1.bf16.msra.mxu0 %v1026
      %1060 = vmatprep.subr.bf16.mxu0 %v1029
      %1061 = vmatpush1.bf16.msra.mxu0 %v1028
      %1062 = vmatprep.subr.bf16.mxu0 %v1031
      %1063 = vmatpush1.bf16.msra.mxu0 %v1030
      %1064 = vmatprep.subr.bf16.mxu0 %v1033
      %1065 = vmatpush1.bf16.msra.mxu0 %v1032
      %1066 = vmatprep.subr.bf16.mxu0 %v1035
      %1067 = vmatpush1.bf16.msra.mxu0 %v1034
      %1068 = vmatprep.subr.bf16.mxu0 %v1037
      %1069 = vmatpush1.bf16.msra.mxu0 %v1036
      %1070 = vmatprep.subr.bf16.mxu0 0
      %1071 = vmatpush1.bf16.msra.mxu0 0
      %1072 = vmatprep.subr.bf16.mxu0 0
      %1073 = vmatpush1.bf16.msra.mxu0 0
      %1074 = vmatprep.subr.bf16.mxu0 0
      %1075 = vmatpush1.bf16.msra.mxu0 0
      %1076 = vmatprep.subr.bf16.mxu0 0
      %1077 = vmatpush1.bf16.msra.mxu0 0
      %1078 = vmatprep.subr.bf16.mxu0 0
      %1079 = vmatpush1.bf16.msra.mxu0 0
      %1080 = vmatprep.subr.bf16.mxu0 0
      %1081 = vmatpush1.bf16.msra.mxu0 0
      %1082 = vmatprep.subr.bf16.mxu0 0
      %1083 = vmatpush1.bf16.msra.mxu0 0
      %1084 = vmatprep.subr.bf16.mxu0 0
      %1085 = vmatpush1.bf16.msra.mxu0 0
      %1086 = vmatprep.mubr.bf16.mxu0 0
      %1087 = vmatmul.mubr.bf16.gmra.mrb[0].mxu0 %v944
      %v1088 = vpop.f32.mrb[0].mxu0
      %v1089 = vadd.f32 %v967, %v1088
      %v1090 = vpop.f32.mrb[0].mxu0
      %v1091 = vadd.f32 %v971, %v1090
      %v1092 = vpop.f32.mrb[0].mxu0
      %v1093 = vadd.f32 %v967, %v1092
      %v1094 = vpop.f32.mrb[0].mxu0
      %v1095 = vadd.f32 %v971, %v1094
      %1096 = vdwg.mxu0
      %v1097 = vmax.f32 %v1089, 0.0
      %v1098 = vmax.f32 %v1091, 0.0
      %v1099 = vmax.f32 %v1093, 0.0
      %v1100 = vmax.f32 %v1095, 0.0
      %v1101 = vpack.c.bf16 %v1099, %v1097
      %v1102 = vpack.c.bf16 %v1100, %v1098
      %v1103 = vld [vmem:[#allocation11] sm:$0xf]
      %v1104 = vld [vmem:[#allocation11 + $0x4] sm:$0xf]
      %v1105 = vld [vmem:[#allocation11 + $0x8] sm:$0xf]
      %v1106 = vld [vmem:[#allocation11 + $0xc] sm:$0xf]
      %v1107 = vld [vmem:[#allocation11 + $0x10] sm:$0xf]
      %v1108 = vld [vmem:[#allocation11 + $0x14] sm:$0xf]
      %v1109 = vld [vmem:[#allocation11 + $0x18] sm:$0xf]
      %v1110 = vld [vmem:[#allocation11 + $0x1c] sm:$0xf]
      %v1111 = vld [vmem:[#allocation11 + $0x20] sm:$0xf]
      %v1112 = vld [vmem:[#allocation11 + $0x24] sm:$0xf]
      %v1113 = vld [vmem:[#allocation11 + $0x28] sm:$0xf]
      %v1114 = vld [vmem:[#allocation11 + $0x2c] sm:$0xf]
      %v1115 = vld [vmem:[#allocation11 + $0x30] sm:$0xf]
      %v1116 = vld [vmem:[#allocation11 + $0x34] sm:$0xf]
      %v1117 = vld [vmem:[#allocation11 + $0x38] sm:$0xf]
      %v1118 = vld [vmem:[#allocation11 + $0x3c] sm:$0xf]
      %v1119 = vld [vmem:[#allocation11 + $0x40] sm:$0xf]
      %v1120 = vld [vmem:[#allocation11 + $0x44] sm:$0xf]
      %v1121 = vld [vmem:[#allocation11 + $0x48] sm:$0xf]
      %v1122 = vld [vmem:[#allocation11 + $0x4c] sm:$0xf]
      %v1123 = vld [vmem:[#allocation11 + $0x50] sm:$0xf]
      %v1124 = vld [vmem:[#allocation11 + $0x54] sm:$0xf]
      %v1125 = vld [vmem:[#allocation11 + $0x58] sm:$0xf]
      %v1126 = vld [vmem:[#allocation11 + $0x5c] sm:$0xf]
      %v1127 = vld [vmem:[#allocation11 + $0x60] sm:$0xf]
      %v1128 = vld [vmem:[#allocation11 + $0x64] sm:$0xf]
      %v1129 = vld [vmem:[#allocation11 + $0x68] sm:$0xf]
      %v1130 = vld [vmem:[#allocation11 + $0x6c] sm:$0xf]
      %v1131 = vld [vmem:[#allocation11 + $0x70] sm:$0xf]
      %v1132 = vld [vmem:[#allocation11 + $0x74] sm:$0xf]
      %v1133 = vld [vmem:[#allocation11 + $0x78] sm:$0xf]
      %v1134 = vld [vmem:[#allocation11 + $0x7c] sm:$0xf]
      %v1135 = vld [vmem:[#allocation4 + $0x3] ss:$0 sm:$0xff]
      %v1168 = vunpack.c.l.b16 %v1103
      %v1169 = vunpack.c.l.b16 %v1104
      %v1170 = vunpack.c.l.b16 %v1105
      %v1171 = vunpack.c.l.b16 %v1106
      %v1172 = vunpack.c.l.b16 %v1107
      %v1173 = vunpack.c.l.b16 %v1108
      %v1174 = vunpack.c.l.b16 %v1109
      %v1175 = vunpack.c.l.b16 %v1110
      %v1176 = vunpack.c.l.b16 %v1111
      %v1177 = vunpack.c.l.b16 %v1112
      %v1178 = vunpack.c.l.b16 %v1113
      %v1179 = vunpack.c.l.b16 %v1114
      %v1180 = vunpack.c.l.b16 %v1115
      %v1181 = vunpack.c.l.b16 %v1116
      %v1182 = vunpack.c.l.b16 %v1117
      %v1183 = vunpack.c.l.b16 %v1118
      %v1184 = vunpack.c.l.b16 %v1119
      %v1185 = vunpack.c.l.b16 %v1120
      %v1186 = vunpack.c.l.b16 %v1121
      %v1187 = vunpack.c.l.b16 %v1122
      %v1188 = vunpack.c.l.b16 %v1123
      %v1189 = vunpack.c.l.b16 %v1124
      %v1190 = vunpack.c.l.b16 %v1125
      %v1191 = vunpack.c.l.b16 %v1126
      %v1192 = vunpack.c.l.b16 %v1127
      %v1193 = vunpack.c.l.b16 %v1128
      %v1194 = vunpack.c.l.b16 %v1129
      %v1195 = vunpack.c.l.b16 %v1130
      %v1196 = vunpack.c.l.b16 %v1131
      %v1197 = vunpack.c.l.b16 %v1132
      %v1198 = vunpack.c.l.b16 %v1133
      %v1199 = vunpack.c.l.b16 %v1134
      %v1200 = vpack.c.b16 %v1169, %v1168
      %v1201 = vpack.c.b16 %v1171, %v1170
      %v1202 = vpack.c.b16 %v1173, %v1172
      %v1203 = vpack.c.b16 %v1175, %v1174
      %v1204 = vpack.c.b16 %v1177, %v1176
      %v1205 = vpack.c.b16 %v1179, %v1178
      %v1206 = vpack.c.b16 %v1181, %v1180
      %v1207 = vpack.c.b16 %v1183, %v1182
      %v1208 = vpack.c.b16 %v1185, %v1184
      %v1209 = vpack.c.b16 %v1187, %v1186
      %v1210 = vpack.c.b16 %v1189, %v1188
      %v1211 = vpack.c.b16 %v1191, %v1190
      %v1212 = vpack.c.b16 %v1193, %v1192
      %v1213 = vpack.c.b16 %v1195, %v1194
      %v1214 = vpack.c.b16 %v1197, %v1196
      %v1215 = vpack.c.b16 %v1199, %v1198
      %1232 = vmatprep.subr.bf16.mxu0 0
      %1233 = vmatpush1.bf16.msra.mxu0 %v1200
      %1234 = vmatprep.subr.bf16.mxu0 0
      %1235 = vmatpush1.bf16.msra.mxu0 %v1201
      %1236 = vmatprep.subr.bf16.mxu0 0
      %1237 = vmatpush1.bf16.msra.mxu0 %v1202
      %1238 = vmatprep.subr.bf16.mxu0 0
      %1239 = vmatpush1.bf16.msra.mxu0 %v1203
      %1240 = vmatprep.subr.bf16.mxu0 0
      %1241 = vmatpush1.bf16.msra.mxu0 %v1204
      %1242 = vmatprep.subr.bf16.mxu0 0
      %1243 = vmatpush1.bf16.msra.mxu0 %v1205
      %1244 = vmatprep.subr.bf16.mxu0 0
      %1245 = vmatpush1.bf16.msra.mxu0 %v1206
      %1246 = vmatprep.subr.bf16.mxu0 0
      %1247 = vmatpush1.bf16.msra.mxu0 %v1207
      %1248 = vmatprep.subr.bf16.mxu0 0
      %1249 = vmatpush1.bf16.msra.mxu0 %v1208
      %1250 = vmatprep.subr.bf16.mxu0 0
      %1251 = vmatpush1.bf16.msra.mxu0 %v1209
      %1252 = vmatprep.subr.bf16.mxu0 0
      %1253 = vmatpush1.bf16.msra.mxu0 %v1210
      %1254 = vmatprep.subr.bf16.mxu0 0
      %1255 = vmatpush1.bf16.msra.mxu0 %v1211
      %1256 = vmatprep.subr.bf16.mxu0 0
      %1257 = vmatpush1.bf16.msra.mxu0 %v1212
      %1258 = vmatprep.subr.bf16.mxu0 0
      %1259 = vmatpush1.bf16.msra.mxu0 %v1213
      %1260 = vmatprep.subr.bf16.mxu0 0
      %1261 = vmatpush1.bf16.msra.mxu0 %v1214
      %1262 = vmatprep.subr.bf16.mxu0 0
      %1263 = vmatpush1.bf16.msra.mxu0 %v1215
      %1264 = vmatprep.mubr.bf16.mxu0 %v1102
      %1265 = vmatmul.mubr.bf16.gmra.mrb[0].mxu0 %v1101
      %v1266 = vpop.f32.mrb[0].mxu0
      %v1267 = vadd.f32 %v1135, %v1266
      %v1268 = vpop.f32.mrb[0].mxu0
      %v1269 = vpop.f32.mrb[0].mxu0
      %v1270 = vadd.f32 %v1135, %v1269
      %v1271 = vpop.f32.mrb[0].mxu0
      %1272 = vdwg.mxu0
      %v1273 = vmax.f32 %v1267, 0.0
      %v1274 = vmax.f32 %v1270, 0.0
      %v1275 = vpack.c.bf16 %v1274, %v1273
      %v1276 = vld [vmem:[#allocation12] sm:$0xf]
      %v1277 = vld [vmem:[#allocation12 + $0x4] sm:$0xf]
      %v1278 = vld [vmem:[#allocation12 + $0x8] sm:$0xf]
      %v1279 = vld [vmem:[#allocation12 + $0xc] sm:$0xf]
      %v1280 = vld [vmem:[#allocation12 + $0x10] sm:$0xf]
      %v1281 = vld [vmem:[#allocation12 + $0x14] sm:$0xf]
      %v1282 = vld [vmem:[#allocation12 + $0x18] sm:$0xf]
      %v1283 = vld [vmem:[#allocation12 + $0x1c] sm:$0xf]
      %v1284 = vld [vmem:[#allocation12 + $0x20] sm:$0xf]
      %v1285 = vld [vmem:[#allocation12 + $0x24] sm:$0xf]
      %v1286 = vld [vmem:[#allocation12 + $0x28] sm:$0xf]
      %v1287 = vld [vmem:[#allocation12 + $0x2c] sm:$0xf]
      %v1288 = vld [vmem:[#allocation12 + $0x30] sm:$0xf]
      %v1289 = vld [vmem:[#allocation12 + $0x34] sm:$0xf]
      %v1290 = vld [vmem:[#allocation12 + $0x38] sm:$0xf]
      %v1291 = vld [vmem:[#allocation12 + $0x3c] sm:$0xf]
      %v1292 = vld [vmem:[#allocation4 + $0x4] ss:$0 sm:$0xff]
      %v1309 = vunpack.c.l.b16 %v1276
      %v1310 = vunpack.c.l.b16 %v1277
      %v1311 = vunpack.c.l.b16 %v1278
      %v1312 = vunpack.c.l.b16 %v1279
      %v1313 = vunpack.c.l.b16 %v1280
      %v1314 = vunpack.c.l.b16 %v1281
      %v1315 = vunpack.c.l.b16 %v1282
      %v1316 = vunpack.c.l.b16 %v1283
      %v1317 = vunpack.c.l.b16 %v1284
      %v1318 = vunpack.c.l.b16 %v1285
      %v1319 = vunpack.c.l.b16 %v1286
      %v1320 = vunpack.c.l.b16 %v1287
      %v1321 = vunpack.c.l.b16 %v1288
      %v1322 = vunpack.c.l.b16 %v1289
      %v1323 = vunpack.c.l.b16 %v1290
      %v1324 = vunpack.c.l.b16 %v1291
      %v1325 = vpack.c.b16 %v1310, %v1309
      %v1326 = vpack.c.b16 %v1312, %v1311
      %v1327 = vpack.c.b16 %v1314, %v1313
      %v1328 = vpack.c.b16 %v1316, %v1315
      %v1329 = vpack.c.b16 %v1318, %v1317
      %v1330 = vpack.c.b16 %v1320, %v1319
      %v1331 = vpack.c.b16 %v1322, %v1321
      %v1332 = vpack.c.b16 %v1324, %v1323
      %1341 = vmatprep.subr.bf16.mxu0 0
      %1342 = vmatpush1.bf16.msra.mxu0 %v1325
      %1343 = vmatprep.subr.bf16.mxu0 0
      %1344 = vmatpush1.bf16.msra.mxu0 %v1326
      %1345 = vmatprep.subr.bf16.mxu0 0
      %1346 = vmatpush1.bf16.msra.mxu0 %v1327
      %1347 = vmatprep.subr.bf16.mxu0 0
      %1348 = vmatpush1.bf16.msra.mxu0 %v1328
      %1349 = vmatprep.subr.bf16.mxu0 0
      %1350 = vmatpush1.bf16.msra.mxu0 %v1329
      %1351 = vmatprep.subr.bf16.mxu0 0
      %1352 = vmatpush1.bf16.msra.mxu0 %v1330
      %1353 = vmatprep.subr.bf16.mxu0 0
      %1354 = vmatpush1.bf16.msra.mxu0 %v1331
      %1355 = vmatprep.subr.bf16.mxu0 0
      %1356 = vmatpush1.bf16.msra.mxu0 %v1332
      %1357 = vmatprep.subr.bf16.mxu0 0
      %1358 = vmatpush1.bf16.msra.mxu0 0
      %1359 = vmatprep.subr.bf16.mxu0 0
      %1360 = vmatpush1.bf16.msra.mxu0 0
      %1361 = vmatprep.subr.bf16.mxu0 0
      %1362 = vmatpush1.bf16.msra.mxu0 0
      %1363 = vmatprep.subr.bf16.mxu0 0
      %1364 = vmatpush1.bf16.msra.mxu0 0
      %1365 = vmatprep.subr.bf16.mxu0 0
      %1366 = vmatpush1.bf16.msra.mxu0 0
      %1367 = vmatprep.subr.bf16.mxu0 0
      %1368 = vmatpush1.bf16.msra.mxu0 0
      %1369 = vmatprep.subr.bf16.mxu0 0
      %1370 = vmatpush1.bf16.msra.mxu0 0
      %1371 = vmatprep.subr.bf16.mxu0 0
      %1372 = vmatpush1.bf16.msra.mxu0 0
      %1373 = vmatprep.mubr.bf16.mxu0 0
      %1374 = vmatmul.mubr.bf16.gmra.mrb[0].mxu0 %v1275
      %v1375 = vpop.f32.mrb[0].mxu0
      %v1376 = vadd.f32 %v1292, %v1375
      %v1377 = vpop.f32.mrb[0].mxu0
      %v1378 = vpop.f32.mrb[0].mxu0
      %v1379 = vadd.f32 %v1292, %v1378
      %v1380 = vpop.f32.mrb[0].mxu0
      %1381 = vdwg.mxu0
      %1384 = vrot.lane.b32.xlu0 %v1376, 127
      %v1385 = vpop.permute.xlu0 %1384
      %1386 = vrot.lane.b32.xlu0 %v1379, 127
      %v1387 = vpop.permute.xlu0 %1386
      %v1390 = vmax.f32 %v1376, %v1385
      %v1391 = vmax.f32 %v1379, %v1387
      %v1392 = vsub.f32 %v1376, %v1390
      %v1393 = vsub.f32 %v1379, %v1391
      %v1394 = vmul.f32 %v1392, 1.442695
      %v1395 = vpow.pop %v1394
      %v1396 = vmul.f32 %v1393, 1.442695
      %v1397 = vpow.pop %v1396
      %1400 = vrot.lane.b32.xlu0 %v1390, 1
      %v1401 = vpop.permute.xlu0 %1400
      %1402 = vrot.lane.b32.xlu0 %v1391, 1
      %v1403 = vpop.permute.xlu0 %1402
      %v1406 = vsub.f32 %v1376, %v1401
      %v1407 = vsub.f32 %v1379, %v1403
      %v1408 = vmul.f32 %v1406, 1.442695
      %v1409 = vpow.pop %v1408
      %v1410 = vmul.f32 %v1407, 1.442695
      %v1411 = vpow.pop %v1410
      %1414 = vrot.lane.b32.xlu0 %v1409, 127
      %v1415 = vpop.permute.xlu0 %1414
      %1416 = vrot.lane.b32.xlu0 %v1411, 127
      %v1417 = vpop.permute.xlu0 %1416
      %v1420 = vadd.f32 %v1395, %v1415
      %v1421 = vadd.f32 %v1397, %v1417
      %v1422 = vrcp.pop %v1420
      %v1423 = vrcp.pop %v1421
      %v1424 = vmul.f32 %v1395, %v1422
      %v1425 = vmul.f32 %v1397, %v1423
      %1427 = vset.pattern.permute.xlu0 0
      %1428 = vperm.xlu0 %1427, %v1424
      %v1429 = vpop.permute.xlu0 %1428
      %1432 = vset.pattern.permute.xlu0 0
      %1433 = vperm.xlu0 %1432, %v1425
      %v1434 = vpop.permute.xlu0 %1433
      %v1436 = vmul.f32 %v1429, %v935
      %v1437 = vmul.f32 %v1434, %v936
      %1440 = vrot.lane.b32.xlu0 %v1422, 1
      %v1441 = vpop.permute.xlu0 %1440
      %1442 = vrot.lane.b32.xlu0 %v1423, 1
      %v1443 = vpop.permute.xlu0 %1442
      %v1446 = vmul.f32 %v1409, %v1441
      %v1447 = vmul.f32 %v1411, %v1443
      %1449 = vset.pattern.permute.xlu0 1
      %1450 = vperm.xlu0 %1449, %v1446
      %v1451 = vpop.permute.xlu0 %1450
      %1454 = vset.pattern.permute.xlu0 1
      %1455 = vperm.xlu0 %1454, %v1447
      %v1456 = vpop.permute.xlu0 %1455
      %v1458 = vmul.f32 %v1451, %v942
      %v1459 = vmul.f32 %v1456, %v943
      %v1460 = vadd.f32 %v1436, %v1458
      %v1461 = vadd.f32 %v1437, %v1459
      %v1462 = vpack.c.bf16 %v1461, %v1460
      %v1463 = vld [vmem:[#allocation14] sm:$0xf]
      %v1464 = vld [vmem:[#allocation14 + $0x4] sm:$0xf]
      %v1465 = vld [vmem:[#allocation14 + $0x8] sm:$0xf]
      %v1466 = vld [vmem:[#allocation14 + $0xc] sm:$0xf]
      %v1467 = vld [vmem:[#allocation14 + $0x10] sm:$0xf]
      %v1468 = vld [vmem:[#allocation14 + $0x14] sm:$0xf]
      %v1469 = vld [vmem:[#allocation14 + $0x18] sm:$0xf]
      %v1470 = vld [vmem:[#allocation14 + $0x1c] sm:$0xf]
      %v1471 = vld [vmem:[#allocation14 + $0x20] sm:$0xf]
      %v1472 = vld [vmem:[#allocation14 + $0x24] sm:$0xf]
      %v1473 = vld [vmem:[#allocation14 + $0x28] sm:$0xf]
      %v1474 = vld [vmem:[#allocation14 + $0x2c] sm:$0xf]
      %v1475 = vld [vmem:[#allocation14 + $0x30] sm:$0xf]
      %v1476 = vld [vmem:[#allocation14 + $0x34] sm:$0xf]
      %v1477 = vld [vmem:[#allocation14 + $0x38] sm:$0xf]
      %v1478 = vld [vmem:[#allocation14 + $0x3c] sm:$0xf]
      %v1479 = vld [vmem:[#allocation4 + $0x5] ss:$0 sm:$0xff]
      %v1496 = vunpack.c.l.b16 %v1463
      %v1497 = vunpack.c.l.b16 %v1464
      %v1498 = vunpack.c.l.b16 %v1465
      %v1499 = vunpack.c.l.b16 %v1466
      %v1500 = vunpack.c.l.b16 %v1467
      %v1501 = vunpack.c.l.b16 %v1468
      %v1502 = vunpack.c.l.b16 %v1469
      %v1503 = vunpack.c.l.b16 %v1470
      %v1504 = vunpack.c.l.b16 %v1471
      %v1505 = vunpack.c.l.b16 %v1472
      %v1506 = vunpack.c.l.b16 %v1473
      %v1507 = vunpack.c.l.b16 %v1474
      %v1508 = vunpack.c.l.b16 %v1475
      %v1509 = vunpack.c.l.b16 %v1476
      %v1510 = vunpack.c.l.b16 %v1477
      %v1511 = vunpack.c.l.b16 %v1478
      %v1512 = vpack.c.b16 %v1497, %v1496
      %v1513 = vpack.c.b16 %v1499, %v1498
      %v1514 = vpack.c.b16 %v1501, %v1500
      %v1515 = vpack.c.b16 %v1503, %v1502
      %v1516 = vpack.c.b16 %v1505, %v1504
      %v1517 = vpack.c.b16 %v1507, %v1506
      %v1518 = vpack.c.b16 %v1509, %v1508
      %v1519 = vpack.c.b16 %v1511, %v1510
      %1528 = vmatprep.subr.bf16.mxu0 0
      %1529 = vmatpush1.bf16.msra.mxu0 %v1512
      %1530 = vmatprep.subr.bf16.mxu0 0
      %1531 = vmatpush1.bf16.msra.mxu0 %v1513
      %1532 = vmatprep.subr.bf16.mxu0 0
      %1533 = vmatpush1.bf16.msra.mxu0 %v1514
      %1534 = vmatprep.subr.bf16.mxu0 0
      %1535 = vmatpush1.bf16.msra.mxu0 %v1515
      %1536 = vmatprep.subr.bf16.mxu0 0
      %1537 = vmatpush1.bf16.msra.mxu0 %v1516
      %1538 = vmatprep.subr.bf16.mxu0 0
      %1539 = vmatpush1.bf16.msra.mxu0 %v1517
      %1540 = vmatprep.subr.bf16.mxu0 0
      %1541 = vmatpush1.bf16.msra.mxu0 %v1518
      %1542 = vmatprep.subr.bf16.mxu0 0
      %1543 = vmatpush1.bf16.msra.mxu0 %v1519
      %1544 = vmatprep.subr.bf16.mxu0 0
      %1545 = vmatpush1.bf16.msra.mxu0 0
      %1546 = vmatprep.subr.bf16.mxu0 0
      %1547 = vmatpush1.bf16.msra.mxu0 0
      %1548 = vmatprep.subr.bf16.mxu0 0
      %1549 = vmatpush1.bf16.msra.mxu0 0
      %1550 = vmatprep.subr.bf16.mxu0 0
      %1551 = vmatpush1.bf16.msra.mxu0 0
      %1552 = vmatprep.subr.bf16.mxu0 0
      %1553 = vmatpush1.bf16.msra.mxu0 0
      %1554 = vmatprep.subr.bf16.mxu0 0
      %1555 = vmatpush1.bf16.msra.mxu0 0
      %1556 = vmatprep.subr.bf16.mxu0 0
      %1557 = vmatpush1.bf16.msra.mxu0 0
      %1558 = vmatprep.subr.bf16.mxu0 0
      %1559 = vmatpush1.bf16.msra.mxu0 0
      %1560 = vmatprep.mubr.bf16.mxu0 0
      %1561 = vmatmul.mubr.bf16.gmra.mrb[0].mxu0 %v1462
      %v1562 = vpop.f32.mrb[0].mxu0
      %v1563 = vadd.f32 %v1479, %v1562
      %v1564 = vpop.f32.mrb[0].mxu0
      %v1565 = vpop.f32.mrb[0].mxu0
      %v1566 = vadd.f32 %v1479, %v1565
      %v1567 = vpop.f32.mrb[0].mxu0
      %1568 = vdwg.mxu0
      %v1569 = vadd.f32 %v1460, %v1563
      %v1570 = vadd.f32 %v1461, %v1566
      %v1571 = vld [vmem:[#allocation4 + $0x6] ss:$0 sm:$0xff]
      %v1572 = vld [vmem:[#allocation4 + $0x7] ss:$0 sm:$0xff]
      %1573 = vadd.xlane.f32.xlu0 %v1569
      %v1574 = vpop.xlane.xlu0 %1573
      %1575 = vadd.xlane.f32.xlu0 %v1570
      %v1576 = vpop.xlane.xlu0 %1575
      %v1577 = vrcp.pop 128.0
      %v1578 = vmul.f32 %v1574, %v1577
      %v1579 = vmul.f32 %v1576, %v1577
      %v1580 = vmul.f32 %v1569, %v1569
      %v1581 = vmul.f32 %v1570, %v1570
      %1582 = vadd.xlane.f32.xlu0 %v1580
      %v1583 = vpop.xlane.xlu0 %1582
      %1584 = vadd.xlane.f32.xlu0 %v1581
      %v1585 = vpop.xlane.xlu0 %1584
      %v1586 = vmul.f32 %v1583, %v1577
      %v1587 = vmul.f32 %v1585, %v1577
      %v1588 = vmul.f32 %v1578, %v1578
      %v1589 = vmul.f32 %v1579, %v1579
      %v1590 = vsub.f32 %v1586, %v1588
      %v1591 = vsub.f32 %v1587, %v1589
      %v1592 = vsub.f32 %v1569, %v1578
      %v1593 = vsub.f32 %v1570, %v1579
      %v1594 = vadd.f32 %v1590, 1e-05
      %v1595 = vadd.f32 %v1591, 1e-05
      %v1596 = vrsqrt.pop %v1594
      %v1597 = vrsqrt.pop %v1595
      %v1598 = vmul.f32 %v1592, %v1596
      %v1599 = vmul.f32 %v1593, %v1597
      %v1600 = vmul.f32 %v1598, %v1571
      %v1601 = vmul.f32 %v1599, %v1571
      %v1602 = vadd.f32 %v1600, %v1572
      %v1603 = vadd.f32 %v1601, %v1572
      %v1604 = vpack.c.bf16 %v1603, %v1602
      %v1605 = vld [vmem:[%s9] sm:$0xff]
      %v1606 = vld [vmem:[%s9 + $0x8] sm:$0xff]
      %v1607 = vld [vmem:[%s9 + $0x10] sm:$0xff]
      %v1608 = vld [vmem:[%s9 + $0x18] sm:$0xff]
      %v1609 = vld [vmem:[%s9 + $0x20] sm:$0xff]
      %v1610 = vld [vmem:[%s9 + $0x28] sm:$0xff]
      %v1611 = vld [vmem:[%s9 + $0x30] sm:$0xff]
      %v1612 = vld [vmem:[%s9 + $0x38] sm:$0xff]
      %v1613 = vld [vmem:[%s9 + $0x40] sm:$0xff]
      %v1614 = vld [vmem:[%s9 + $0x48] sm:$0xff]
      %v1615 = vld [vmem:[%s9 + $0x50] sm:$0xff]
      %v1616 = vld [vmem:[%s9 + $0x58] sm:$0xff]
      %v1617 = vld [vmem:[%s9 + $0x60] sm:$0xff]
      %v1618 = vld [vmem:[%s9 + $0x68] sm:$0xff]
      %v1619 = vld [vmem:[%s9 + $0x70] sm:$0xff]
      %v1620 = vld [vmem:[%s9 + $0x78] sm:$0xff]
      %v1621 = vld [vmem:[%s9 + $0x80] sm:$0xff]
      %v1622 = vld [vmem:[%s9 + $0x88] sm:$0xff]
      %v1623 = vld [vmem:[%s9 + $0x90] sm:$0xff]
      %v1624 = vld [vmem:[%s9 + $0x98] sm:$0xff]
      %v1625 = vld [vmem:[%s9 + $0xa0] sm:$0xff]
      %v1626 = vld [vmem:[%s9 + $0xa8] sm:$0xff]
      %v1627 = vld [vmem:[%s9 + $0xb0] sm:$0xff]
      %v1628 = vld [vmem:[%s9 + $0xb8] sm:$0xff]
      %v1629 = vld [vmem:[%s9 + $0xc0] sm:$0xff]
      %v1630 = vld [vmem:[%s9 + $0xc8] sm:$0xff]
      %v1631 = vld [vmem:[%s9 + $0xd0] sm:$0xff]
      %v1632 = vld [vmem:[%s9 + $0xd8] sm:$0xff]
      %v1633 = vld [vmem:[%s9 + $0xe0] sm:$0xff]
      %v1634 = vld [vmem:[%s9 + $0xe8] sm:$0xff]
      %v1635 = vld [vmem:[%s9 + $0xf0] sm:$0xff]
      %v1636 = vld [vmem:[%s9 + $0xf8] sm:$0xff]
      %s1637 = scalar_lea.vmem [#allocation4], 32
      %v1638 = vld [vmem:[%s1637] ss:$8 sm:$0xf]
      %v1640 = vlaneseq
      %v1641 = vshrl.u32 %v1640, 7
      %v1642 = vsub.s32 0, %v1641
      %v1643 = vrot.slane %v1638, %v1642
      %v1644 = vlaneseq
      %v1645 = vshrl.u32 %v1644, 7
      %v1646 = vsub.s32 1, %v1645
      %v1647 = vrot.slane %v1638, %v1646
      %v1648 = vlaneseq
      %v1649 = vshrl.u32 %v1648, 7
      %v1650 = vsub.s32 2, %v1649
      %v1651 = vrot.slane %v1638, %v1650
      %v1652 = vlaneseq
      %v1653 = vshrl.u32 %v1652, 7
      %v1654 = vsub.s32 3, %v1653
      %v1655 = vrot.slane %v1638, %v1654
      %v1692 = vunpack.c.l.b16 %v1605
      %v1693 = vunpack.c.h.b16 %v1605
      %v1694 = vunpack.c.l.b16 %v1606
      %v1695 = vunpack.c.h.b16 %v1606
      %v1696 = vunpack.c.l.b16 %v1607
      %v1697 = vunpack.c.h.b16 %v1607
      %v1698 = vunpack.c.l.b16 %v1608
      %v1699 = vunpack.c.h.b16 %v1608
      %v1700 = vunpack.c.l.b16 %v1609
      %v1701 = vunpack.c.h.b16 %v1609
      %v1702 = vunpack.c.l.b16 %v1610
      %v1703 = vunpack.c.h.b16 %v1610
      %v1704 = vunpack.c.l.b16 %v1611
      %v1705 = vunpack.c.h.b16 %v1611
      %v1706 = vunpack.c.l.b16 %v1612
      %v1707 = vunpack.c.h.b16 %v1612
      %v1708 = vunpack.c.l.b16 %v1613
      %v1709 = vunpack.c.h.b16 %v1613
      %v1710 = vunpack.c.l.b16 %v1614
      %v1711 = vunpack.c.h.b16 %v1614
      %v1712 = vunpack.c.l.b16 %v1615
      %v1713 = vunpack.c.h.b16 %v1615
      %v1714 = vunpack.c.l.b16 %v1616
      %v1715 = vunpack.c.h.b16 %v1616
      %v1716 = vunpack.c.l.b16 %v1617
      %v1717 = vunpack.c.h.b16 %v1617
      %v1718 = vunpack.c.l.b16 %v1618
      %v1719 = vunpack.c.h.b16 %v1618
      %v1720 = vunpack.c.l.b16 %v1619
      %v1721 = vunpack.c.h.b16 %v1619
      %v1722 = vunpack.c.l.b16 %v1620
      %v1723 = vunpack.c.h.b16 %v1620
      %v1724 = vunpack.c.l.b16 %v1621
      %v1725 = vunpack.c.h.b16 %v1621
      %v1726 = vunpack.c.l.b16 %v1622
      %v1727 = vunpack.c.h.b16 %v1622
      %v1728 = vunpack.c.l.b16 %v1623
      %v1729 = vunpack.c.h.b16 %v1623
      %v1730 = vunpack.c.l.b16 %v1624
      %v1731 = vunpack.c.h.b16 %v1624
      %v1732 = vunpack.c.l.b16 %v1625
      %v1733 = vunpack.c.h.b16 %v1625
      %v1734 = vunpack.c.l.b16 %v1626
      %v1735 = vunpack.c.h.b16 %v1626
      %v1736 = vunpack.c.l.b16 %v1627
      %v1737 = vunpack.c.h.b16 %v1627
      %v1738 = vunpack.c.l.b16 %v1628
      %v1739 = vunpack.c.h.b16 %v1628
      %v1740 = vunpack.c.l.b16 %v1629
      %v1741 = vunpack.c.h.b16 %v1629
      %v1742 = vunpack.c.l.b16 %v1630
      %v1743 = vunpack.c.h.b16 %v1630
      %v1744 = vunpack.c.l.b16 %v1631
      %v1745 = vunpack.c.h.b16 %v1631
      %v1746 = vunpack.c.l.b16 %v1632
      %v1747 = vunpack.c.h.b16 %v1632
      %v1748 = vunpack.c.l.b16 %v1633
      %v1749 = vunpack.c.h.b16 %v1633
      %v1750 = vunpack.c.l.b16 %v1634
      %v1751 = vunpack.c.h.b16 %v1634
      %v1752 = vunpack.c.l.b16 %v1635
      %v1753 = vunpack.c.h.b16 %v1635
      %v1754 = vunpack.c.l.b16 %v1636
      %v1755 = vunpack.c.h.b16 %v1636
      %v1756 = vpack.c.b16 %v1696, %v1692
      %v1757 = vpack.c.b16 %v1697, %v1693
      %v1758 = vpack.c.b16 %v1698, %v1694
      %v1759 = vpack.c.b16 %v1699, %v1695
      %v1760 = vpack.c.b16 %v1704, %v1700
      %v1761 = vpack.c.b16 %v1705, %v1701
      %v1762 = vpack.c.b16 %v1706, %v1702
      %v1763 = vpack.c.b16 %v1707, %v1703
      %v1764 = vpack.c.b16 %v1712, %v1708
      %v1765 = vpack.c.b16 %v1713, %v1709
      %v1766 = vpack.c.b16 %v1714, %v1710
      %v1767 = vpack.c.b16 %v1715, %v1711
      %v1768 = vpack.c.b16 %v1720, %v1716
      %v1769 = vpack.c.b16 %v1721, %v1717
      %v1770 = vpack.c.b16 %v1722, %v1718
      %v1771 = vpack.c.b16 %v1723, %v1719
      %v1772 = vpack.c.b16 %v1728, %v1724
      %v1773 = vpack.c.b16 %v1729, %v1725
      %v1774 = vpack.c.b16 %v1730, %v1726
      %v1775 = vpack.c.b16 %v1731, %v1727
      %v1776 = vpack.c.b16 %v1736, %v1732
      %v1777 = vpack.c.b16 %v1737, %v1733
      %v1778 = vpack.c.b16 %v1738, %v1734
      %v1779 = vpack.c.b16 %v1739, %v1735
      %v1780 = vpack.c.b16 %v1744, %v1740
      %v1781 = vpack.c.b16 %v1745, %v1741
      %v1782 = vpack.c.b16 %v1746, %v1742
      %v1783 = vpack.c.b16 %v1747, %v1743
      %v1784 = vpack.c.b16 %v1752, %v1748
      %v1785 = vpack.c.b16 %v1753, %v1749
      %v1786 = vpack.c.b16 %v1754, %v1750
      %v1787 = vpack.c.b16 %v1755, %v1751
      %1820 = vmatprep.subr.bf16.mxu0 %v1757
      %1821 = vmatpush1.bf16.msra.mxu0 %v1756
      %1822 = vmatprep.subr.bf16.mxu0 %v1761
      %1823 = vmatpush1.bf16.msra.mxu0 %v1760
      %1824 = vmatprep.subr.bf16.mxu0 %v1765
      %1825 = vmatpush1.bf16.msra.mxu0 %v1764
      %1826 = vmatprep.subr.bf16.mxu0 %v1769
      %1827 = vmatpush1.bf16.msra.mxu0 %v1768
      %1828 = vmatprep.subr.bf16.mxu0 %v1773
      %1829 = vmatpush1.bf16.msra.mxu0 %v1772
      %1830 = vmatprep.subr.bf16.mxu0 %v1777
      %1831 = vmatpush1.bf16.msra.mxu0 %v1776
      %1832 = vmatprep.subr.bf16.mxu0 %v1781
      %1833 = vmatpush1.bf16.msra.mxu0 %v1780
      %1834 = vmatprep.subr.bf16.mxu0 %v1785
      %1835 = vmatpush1.bf16.msra.mxu0 %v1784
      %1836 = vmatprep.subr.bf16.mxu0 0
      %1837 = vmatpush1.bf16.msra.mxu0 0
      %1838 = vmatprep.subr.bf16.mxu0 0
      %1839 = vmatpush1.bf16.msra.mxu0 0
      %1840 = vmatprep.subr.bf16.mxu0 0
      %1841 = vmatpush1.bf16.msra.mxu0 0
      %1842 = vmatprep.subr.bf16.mxu0 0
      %1843 = vmatpush1.bf16.msra.mxu0 0
      %1844 = vmatprep.subr.bf16.mxu0 0
      %1845 = vmatpush1.bf16.msra.mxu0 0
      %1846 = vmatprep.subr.bf16.mxu0 0
      %1847 = vmatpush1.bf16.msra.mxu0 0
      %1848 = vmatprep.subr.bf16.mxu0 0
      %1849 = vmatpush1.bf16.msra.mxu0 0
      %1850 = vmatprep.subr.bf16.mxu0 0
      %1851 = vmatpush1.bf16.msra.mxu0 0
      %1852 = vmatprep.mubr.bf16.mxu0 0
      %1853 = vmatmul.mubr.bf16.gmra.mrb[0].mxu0 %v1604
      %v1854 = vpop.f32.mrb[0].mxu0
      %v1855 = vadd.f32 %v1643, %v1854
      %v1856 = vpop.f32.mrb[0].mxu0
      %v1857 = vadd.f32 %v1647, %v1856
      %v1858 = vpop.f32.mrb[0].mxu0
      %v1859 = vadd.f32 %v1643, %v1858
      %v1860 = vpop.f32.mrb[0].mxu0
      %v1861 = vadd.f32 %v1647, %v1860
      %1862 = vdwg.mxu0
      %1863 = vmatprep.subr.bf16.mxu0 %v1759
      %1864 = vmatpush1.bf16.msra.mxu0 %v1758
      %1865 = vmatprep.subr.bf16.mxu0 %v1763
      %1866 = vmatpush1.bf16.msra.mxu0 %v1762
      %1867 = vmatprep.subr.bf16.mxu0 %v1767
      %1868 = vmatpush1.bf16.msra.mxu0 %v1766
      %1869 = vmatprep.subr.bf16.mxu0 %v1771
      %1870 = vmatpush1.bf16.msra.mxu0 %v1770
      %1871 = vmatprep.subr.bf16.mxu0 %v1775
      %1872 = vmatpush1.bf16.msra.mxu0 %v1774
      %1873 = vmatprep.subr.bf16.mxu0 %v1779
      %1874 = vmatpush1.bf16.msra.mxu0 %v1778
      %1875 = vmatprep.subr.bf16.mxu0 %v1783
      %1876 = vmatpush1.bf16.msra.mxu0 %v1782
      %1877 = vmatprep.subr.bf16.mxu0 %v1787
      %1878 = vmatpush1.bf16.msra.mxu0 %v1786
      %1879 = vmatprep.subr.bf16.mxu0 0
      %1880 = vmatpush1.bf16.msra.mxu0 0
      %1881 = vmatprep.subr.bf16.mxu0 0
      %1882 = vmatpush1.bf16.msra.mxu0 0
      %1883 = vmatprep.subr.bf16.mxu0 0
      %1884 = vmatpush1.bf16.msra.mxu0 0
      %1885 = vmatprep.subr.bf16.mxu0 0
      %1886 = vmatpush1.bf16.msra.mxu0 0
      %1887 = vmatprep.subr.bf16.mxu0 0
      %1888 = vmatpush1.bf16.msra.mxu0 0
      %1889 = vmatprep.subr.bf16.mxu0 0
      %1890 = vmatpush1.bf16.msra.mxu0 0
      %1891 = vmatprep.subr.bf16.mxu0 0
      %1892 = vmatpush1.bf16.msra.mxu0 0
      %1893 = vmatprep.subr.bf16.mxu0 0
      %1894 = vmatpush1.bf16.msra.mxu0 0
      %1895 = vmatprep.mubr.bf16.mxu0 0
      %1896 = vmatmul.mubr.bf16.gmra.mrb[0].mxu0 %v1604
      %v1897 = vpop.f32.mrb[0].mxu0
      %v1898 = vadd.f32 %v1651, %v1897
      %v1899 = vpop.f32.mrb[0].mxu0
      %v1900 = vadd.f32 %v1655, %v1899
      %v1901 = vpop.f32.mrb[0].mxu0
      %v1902 = vadd.f32 %v1651, %v1901
      %v1903 = vpop.f32.mrb[0].mxu0
      %v1904 = vadd.f32 %v1655, %v1903
      %1905 = vdwg.mxu0
      %v1906 = vmax.f32 %v1855, 0.0
      %v1907 = vmax.f32 %v1857, 0.0
      %v1908 = vmax.f32 %v1898, 0.0
      %v1909 = vmax.f32 %v1900, 0.0
      %v1910 = vmax.f32 %v1859, 0.0
      %v1911 = vmax.f32 %v1861, 0.0
      %v1912 = vmax.f32 %v1902, 0.0
      %v1913 = vmax.f32 %v1904, 0.0
      %v1914 = vpack.c.bf16 %v1910, %v1906
      %v1915 = vpack.c.bf16 %v1911, %v1907
      %v1916 = vpack.c.bf16 %v1912, %v1908
      %v1917 = vpack.c.bf16 %v1913, %v1909
      %v1918 = vld [vmem:[#allocation15] sm:$0xf]
      %v1919 = vld [vmem:[#allocation15 + $0x4] sm:$0xf]
      %v1920 = vld [vmem:[#allocation15 + $0x8] sm:$0xf]
      %v1921 = vld [vmem:[#allocation15 + $0xc] sm:$0xf]
      %v1922 = vld [vmem:[#allocation15 + $0x10] sm:$0xf]
      %v1923 = vld [vmem:[#allocation15 + $0x14] sm:$0xf]
      %v1924 = vld [vmem:[#allocation15 + $0x18] sm:$0xf]
      %v1925 = vld [vmem:[#allocation15 + $0x1c] sm:$0xf]
      %v1926 = vld [vmem:[#allocation15 + $0x20] sm:$0xf]
      %v1927 = vld [vmem:[#allocation15 + $0x24] sm:$0xf]
      %v1928 = vld [vmem:[#allocation15 + $0x28] sm:$0xf]
      %v1929 = vld [vmem:[#allocation15 + $0x2c] sm:$0xf]
      %v1930 = vld [vmem:[#allocation15 + $0x30] sm:$0xf]
      %v1931 = vld [vmem:[#allocation15 + $0x34] sm:$0xf]
      %v1932 = vld [vmem:[#allocation15 + $0x38] sm:$0xf]
      %v1933 = vld [vmem:[#allocation15 + $0x3c] sm:$0xf]
      %v1934 = vld [vmem:[#allocation15 + $0x40] sm:$0xf]
      %v1935 = vld [vmem:[#allocation15 + $0x44] sm:$0xf]
      %v1936 = vld [vmem:[#allocation15 + $0x48] sm:$0xf]
      %v1937 = vld [vmem:[#allocation15 + $0x4c] sm:$0xf]
      %v1938 = vld [vmem:[#allocation15 + $0x50] sm:$0xf]
      %v1939 = vld [vmem:[#allocation15 + $0x54] sm:$0xf]
      %v1940 = vld [vmem:[#allocation15 + $0x58] sm:$0xf]
      %v1941 = vld [vmem:[#allocation15 + $0x5c] sm:$0xf]
      %v1942 = vld [vmem:[#allocation15 + $0x60] sm:$0xf]
      %v1943 = vld [vmem:[#allocation15 + $0x64] sm:$0xf]
      %v1944 = vld [vmem:[#allocation15 + $0x68] sm:$0xf]
      %v1945 = vld [vmem:[#allocation15 + $0x6c] sm:$0xf]
      %v1946 = vld [vmem:[#allocation15 + $0x70] sm:$0xf]
      %v1947 = vld [vmem:[#allocation15 + $0x74] sm:$0xf]
      %v1948 = vld [vmem:[#allocation15 + $0x78] sm:$0xf]
      %v1949 = vld [vmem:[#allocation15 + $0x7c] sm:$0xf]
      %v1950 = vld [vmem:[#allocation15 + $0x80] sm:$0xf]
      %v1951 = vld [vmem:[#allocation15 + $0x84] sm:$0xf]
      %v1952 = vld [vmem:[#allocation15 + $0x88] sm:$0xf]
      %v1953 = vld [vmem:[#allocation15 + $0x8c] sm:$0xf]
      %v1954 = vld [vmem:[#allocation15 + $0x90] sm:$0xf]
      %v1955 = vld [vmem:[#allocation15 + $0x94] sm:$0xf]
      %v1956 = vld [vmem:[#allocation15 + $0x98] sm:$0xf]
      %v1957 = vld [vmem:[#allocation15 + $0x9c] sm:$0xf]
      %v1958 = vld [vmem:[#allocation15 + $0xa0] sm:$0xf]
      %v1959 = vld [vmem:[#allocation15 + $0xa4] sm:$0xf]
      %v1960 = vld [vmem:[#allocation15 + $0xa8] sm:$0xf]
      %v1961 = vld [vmem:[#allocation15 + $0xac] sm:$0xf]
      %v1962 = vld [vmem:[#allocation15 + $0xb0] sm:$0xf]
      %v1963 = vld [vmem:[#allocation15 + $0xb4] sm:$0xf]
      %v1964 = vld [vmem:[#allocation15 + $0xb8] sm:$0xf]
      %v1965 = vld [vmem:[#allocation15 + $0xbc] sm:$0xf]
      %v1966 = vld [vmem:[#allocation15 + $0xc0] sm:$0xf]
      %v1967 = vld [vmem:[#allocation15 + $0xc4] sm:$0xf]
      %v1968 = vld [vmem:[#allocation15 + $0xc8] sm:$0xf]
      %v1969 = vld [vmem:[#allocation15 + $0xcc] sm:$0xf]
      %v1970 = vld [vmem:[#allocation15 + $0xd0] sm:$0xf]
      %v1971 = vld [vmem:[#allocation15 + $0xd4] sm:$0xf]
      %v1972 = vld [vmem:[#allocation15 + $0xd8] sm:$0xf]
      %v1973 = vld [vmem:[#allocation15 + $0xdc] sm:$0xf]
      %v1974 = vld [vmem:[#allocation15 + $0xe0] sm:$0xf]
      %v1975 = vld [vmem:[#allocation15 + $0xe4] sm:$0xf]
      %v1976 = vld [vmem:[#allocation15 + $0xe8] sm:$0xf]
      %v1977 = vld [vmem:[#allocation15 + $0xec] sm:$0xf]
      %v1978 = vld [vmem:[#allocation15 + $0xf0] sm:$0xf]
      %v1979 = vld [vmem:[#allocation15 + $0xf4] sm:$0xf]
      %v1980 = vld [vmem:[#allocation15 + $0xf8] sm:$0xf]
      %v1981 = vld [vmem:[#allocation15 + $0xfc] sm:$0xf]
      %v1982 = vld [vmem:[#allocation4 + $0x21] ss:$0 sm:$0xff]
      %v2047 = vunpack.c.l.b16 %v1918
      %v2048 = vunpack.c.l.b16 %v1919
      %v2049 = vunpack.c.l.b16 %v1920
      %v2050 = vunpack.c.l.b16 %v1921
      %v2051 = vunpack.c.l.b16 %v1922
      %v2052 = vunpack.c.l.b16 %v1923
      %v2053 = vunpack.c.l.b16 %v1924
      %v2054 = vunpack.c.l.b16 %v1925
      %v2055 = vunpack.c.l.b16 %v1926
      %v2056 = vunpack.c.l.b16 %v1927
      %v2057 = vunpack.c.l.b16 %v1928
      %v2058 = vunpack.c.l.b16 %v1929
      %v2059 = vunpack.c.l.b16 %v1930
      %v2060 = vunpack.c.l.b16 %v1931
      %v2061 = vunpack.c.l.b16 %v1932
      %v2062 = vunpack.c.l.b16 %v1933
      %v2063 = vunpack.c.l.b16 %v1934
      %v2064 = vunpack.c.l.b16 %v1935
      %v2065 = vunpack.c.l.b16 %v1936
      %v2066 = vunpack.c.l.b16 %v1937
      %v2067 = vunpack.c.l.b16 %v1938
      %v2068 = vunpack.c.l.b16 %v1939
      %v2069 = vunpack.c.l.b16 %v1940
      %v2070 = vunpack.c.l.b16 %v1941
      %v2071 = vunpack.c.l.b16 %v1942
      %v2072 = vunpack.c.l.b16 %v1943
      %v2073 = vunpack.c.l.b16 %v1944
      %v2074 = vunpack.c.l.b16 %v1945
      %v2075 = vunpack.c.l.b16 %v1946
      %v2076 = vunpack.c.l.b16 %v1947
      %v2077 = vunpack.c.l.b16 %v1948
      %v2078 = vunpack.c.l.b16 %v1949
      %v2079 = vunpack.c.l.b16 %v1950
      %v2080 = vunpack.c.l.b16 %v1951
      %v2081 = vunpack.c.l.b16 %v1952
      %v2082 = vunpack.c.l.b16 %v1953
      %v2083 = vunpack.c.l.b16 %v1954
      %v2084 = vunpack.c.l.b16 %v1955
      %v2085 = vunpack.c.l.b16 %v1956
      %v2086 = vunpack.c.l.b16 %v1957
      %v2087 = vunpack.c.l.b16 %v1958
      %v2088 = vunpack.c.l.b16 %v1959
      %v2089 = vunpack.c.l.b16 %v1960
      %v2090 = vunpack.c.l.b16 %v1961
      %v2091 = vunpack.c.l.b16 %v1962
      %v2092 = vunpack.c.l.b16 %v1963
      %v2093 = vunpack.c.l.b16 %v1964
      %v2094 = vunpack.c.l.b16 %v1965
      %v2095 = vunpack.c.l.b16 %v1966
      %v2096 = vunpack.c.l.b16 %v1967
      %v2097 = vunpack.c.l.b16 %v1968
      %v2098 = vunpack.c.l.b16 %v1969
      %v2099 = vunpack.c.l.b16 %v1970
      %v2100 = vunpack.c.l.b16 %v1971
      %v2101 = vunpack.c.l.b16 %v1972
      %v2102 = vunpack.c.l.b16 %v1973
      %v2103 = vunpack.c.l.b16 %v1974
      %v2104 = vunpack.c.l.b16 %v1975
      %v2105 = vunpack.c.l.b16 %v1976
      %v2106 = vunpack.c.l.b16 %v1977
      %v2107 = vunpack.c.l.b16 %v1978
      %v2108 = vunpack.c.l.b16 %v1979
      %v2109 = vunpack.c.l.b16 %v1980
      %v2110 = vunpack.c.l.b16 %v1981
      %v2111 = vpack.c.b16 %v2048, %v2047
      %v2112 = vpack.c.b16 %v2050, %v2049
      %v2113 = vpack.c.b16 %v2052, %v2051
      %v2114 = vpack.c.b16 %v2054, %v2053
      %v2115 = vpack.c.b16 %v2056, %v2055
      %v2116 = vpack.c.b16 %v2058, %v2057
      %v2117 = vpack.c.b16 %v2060, %v2059
      %v2118 = vpack.c.b16 %v2062, %v2061
      %v2119 = vpack.c.b16 %v2064, %v2063
      %v2120 = vpack.c.b16 %v2066, %v2065
      %v2121 = vpack.c.b16 %v2068, %v2067
      %v2122 = vpack.c.b16 %v2070, %v2069
      %v2123 = vpack.c.b16 %v2072, %v2071
      %v2124 = vpack.c.b16 %v2074, %v2073
      %v2125 = vpack.c.b16 %v2076, %v2075
      %v2126 = vpack.c.b16 %v2078, %v2077
      %v2127 = vpack.c.b16 %v2080, %v2079
      %v2128 = vpack.c.b16 %v2082, %v2081
      %v2129 = vpack.c.b16 %v2084, %v2083
      %v2130 = vpack.c.b16 %v2086, %v2085
      %v2131 = vpack.c.b16 %v2088, %v2087
      %v2132 = vpack.c.b16 %v2090, %v2089
      %v2133 = vpack.c.b16 %v2092, %v2091
      %v2134 = vpack.c.b16 %v2094, %v2093
      %v2135 = vpack.c.b16 %v2096, %v2095
      %v2136 = vpack.c.b16 %v2098, %v2097
      %v2137 = vpack.c.b16 %v2100, %v2099
      %v2138 = vpack.c.b16 %v2102, %v2101
      %v2139 = vpack.c.b16 %v2104, %v2103
      %v2140 = vpack.c.b16 %v2106, %v2105
      %v2141 = vpack.c.b16 %v2108, %v2107
      %v2142 = vpack.c.b16 %v2110, %v2109
      %2175 = vmatprep.subr.bf16.mxu0 0
      %2176 = vmatpush1.bf16.msra.mxu0 %v2111
      %2177 = vmatprep.subr.bf16.mxu0 0
      %2178 = vmatpush1.bf16.msra.mxu0 %v2112
      %2179 = vmatprep.subr.bf16.mxu0 0
      %2180 = vmatpush1.bf16.msra.mxu0 %v2113
      %2181 = vmatprep.subr.bf16.mxu0 0
      %2182 = vmatpush1.bf16.msra.mxu0 %v2114
      %2183 = vmatprep.subr.bf16.mxu0 0
      %2184 = vmatpush1.bf16.msra.mxu0 %v2115
      %2185 = vmatprep.subr.bf16.mxu0 0
      %2186 = vmatpush1.bf16.msra.mxu0 %v2116
      %2187 = vmatprep.subr.bf16.mxu0 0
      %2188 = vmatpush1.bf16.msra.mxu0 %v2117
      %2189 = vmatprep.subr.bf16.mxu0 0
      %2190 = vmatpush1.bf16.msra.mxu0 %v2118
      %2191 = vmatprep.subr.bf16.mxu0 0
      %2192 = vmatpush1.bf16.msra.mxu0 %v2119
      %2193 = vmatprep.subr.bf16.mxu0 0
      %2194 = vmatpush1.bf16.msra.mxu0 %v2120
      %2195 = vmatprep.subr.bf16.mxu0 0
      %2196 = vmatpush1.bf16.msra.mxu0 %v2121
      %2197 = vmatprep.subr.bf16.mxu0 0
      %2198 = vmatpush1.bf16.msra.mxu0 %v2122
      %2199 = vmatprep.subr.bf16.mxu0 0
      %2200 = vmatpush1.bf16.msra.mxu0 %v2123
      %2201 = vmatprep.subr.bf16.mxu0 0
      %2202 = vmatpush1.bf16.msra.mxu0 %v2124
      %2203 = vmatprep.subr.bf16.mxu0 0
      %2204 = vmatpush1.bf16.msra.mxu0 %v2125
      %2205 = vmatprep.subr.bf16.mxu0 0
      %2206 = vmatpush1.bf16.msra.mxu0 %v2126
      %2207 = vmatprep.mubr.bf16.mxu0 %v1915
      %2208 = vmatmul.mubr.bf16.gmra.mrb[0].mxu0 %v1914
      %v2209 = vpop.f32.mrb[0].mxu0
      %v2210 = vadd.f32 %v1982, %v2209
      %v2211 = vpop.f32.mrb[0].mxu0
      %v2212 = vpop.f32.mrb[0].mxu0
      %v2213 = vadd.f32 %v1982, %v2212
      %v2214 = vpop.f32.mrb[0].mxu0
      %2215 = vdwg.mxu0
      %2216 = vmatprep.subr.bf16.mxu0 0
      %2217 = vmatpush1.bf16.msra.mxu0 %v2127
      %2218 = vmatprep.subr.bf16.mxu0 0
      %2219 = vmatpush1.bf16.msra.mxu0 %v2128
      %2220 = vmatprep.subr.bf16.mxu0 0
      %2221 = vmatpush1.bf16.msra.mxu0 %v2129
      %2222 = vmatprep.subr.bf16.mxu0 0
      %2223 = vmatpush1.bf16.msra.mxu0 %v2130
      %2224 = vmatprep.subr.bf16.mxu0 0
      %2225 = vmatpush1.bf16.msra.mxu0 %v2131
      %2226 = vmatprep.subr.bf16.mxu0 0
      %2227 = vmatpush1.bf16.msra.mxu0 %v2132
      %2228 = vmatprep.subr.bf16.mxu0 0
      %2229 = vmatpush1.bf16.msra.mxu0 %v2133
      %2230 = vmatprep.subr.bf16.mxu0 0
      %2231 = vmatpush1.bf16.msra.mxu0 %v2134
      %2232 = vmatprep.subr.bf16.mxu0 0
      %2233 = vmatpush1.bf16.msra.mxu0 %v2135
      %2234 = vmatprep.subr.bf16.mxu0 0
      %2235 = vmatpush1.bf16.msra.mxu0 %v2136
      %2236 = vmatprep.subr.bf16.mxu0 0
      %2237 = vmatpush1.bf16.msra.mxu0 %v2137
      %2238 = vmatprep.subr.bf16.mxu0 0
      %2239 = vmatpush1.bf16.msra.mxu0 %v2138
      %2240 = vmatprep.subr.bf16.mxu0 0
      %2241 = vmatpush1.bf16.msra.mxu0 %v2139
      %2242 = vmatprep.subr.bf16.mxu0 0
      %2243 = vmatpush1.bf16.msra.mxu0 %v2140
      %2244 = vmatprep.subr.bf16.mxu0 0
      %2245 = vmatpush1.bf16.msra.mxu0 %v2141
      %2246 = vmatprep.subr.bf16.mxu0 0
      %2247 = vmatpush1.bf16.msra.mxu0 %v2142
      %2248 = vmatprep.mubr.bf16.mxu0 %v1917
      %2249 = vmatmul.mubr.bf16.gmra.mrb[0].mxu0 %v1916
      %v2250 = vpop.f32.mrb[0].mxu0
      %v2251 = vadd.f32 %v2210, %v2250
      %v2252 = vpop.f32.mrb[0].mxu0
      %v2253 = vpop.f32.mrb[0].mxu0
      %v2254 = vadd.f32 %v2213, %v2253
      %v2255 = vpop.f32.mrb[0].mxu0
      %2256 = vdwg.mxu0
      %v2257 = vadd.f32 %v1602, %v2251
      %v2258 = vadd.f32 %v1603, %v2254
      %v2259 = vld [vmem:[#allocation4 + $0x22] ss:$0 sm:$0xff]
      %v2260 = vld [vmem:[#allocation4 + $0x23] ss:$0 sm:$0xff]
      %2261 = vadd.xlane.f32.xlu0 %v2257
      %v2262 = vpop.xlane.xlu0 %2261
      %2263 = vadd.xlane.f32.xlu0 %v2258
      %v2264 = vpop.xlane.xlu0 %2263
      %v2265 = vmul.f32 %v2262, %v1577
      %v2266 = vmul.f32 %v2264, %v1577
      %v2267 = vmul.f32 %v2257, %v2257
      %v2268 = vmul.f32 %v2258, %v2258
      %2269 = vadd.xlane.f32.xlu0 %v2267
      %v2270 = vpop.xlane.xlu0 %2269
      %2271 = vadd.xlane.f32.xlu0 %v2268
      %v2272 = vpop.xlane.xlu0 %2271
      %v2273 = vmul.f32 %v2270, %v1577
      %v2274 = vmul.f32 %v2272, %v1577
      %v2275 = vmul.f32 %v2265, %v2265
      %v2276 = vmul.f32 %v2266, %v2266
      %v2277 = vsub.f32 %v2273, %v2275
      %v2278 = vsub.f32 %v2274, %v2276
      %v2279 = vsub.f32 %v2257, %v2265
      %v2280 = vsub.f32 %v2258, %v2266
      %v2281 = vadd.f32 %v2277, 1e-05
      %v2282 = vadd.f32 %v2278, 1e-05
      %v2283 = vrsqrt.pop %v2281
      %v2284 = vrsqrt.pop %v2282
      %v2285 = vmul.f32 %v2279, %v2283
      %v2286 = vmul.f32 %v2280, %v2284
      %v2287 = vmul.f32 %v2285, %v2259
      %v2288 = vmul.f32 %v2286, %v2259
      %v2289 = vadd.f32 %v2287, %v2260
      %v2290 = vadd.f32 %v2288, %v2260
      %v2291 = vpack.c.bf16 %v2290, %v2289
      %v2292 = vld [vmem:[#allocation17] sm:$0xff]
      %v2293 = vld [vmem:[#allocation17 + $0x8] sm:$0xff]
      %v2294 = vld [vmem:[#allocation17 + $0x10] sm:$0xff]
      %v2295 = vld [vmem:[#allocation17 + $0x18] sm:$0xff]
      %v2296 = vld [vmem:[#allocation17 + $0x20] sm:$0xff]
      %v2297 = vld [vmem:[#allocation17 + $0x28] sm:$0xff]
      %v2298 = vld [vmem:[#allocation17 + $0x30] sm:$0xff]
      %v2299 = vld [vmem:[#allocation17 + $0x38] sm:$0xff]
      %v2300 = vld [vmem:[#allocation17 + $0x40] sm:$0xff]
      %v2301 = vld [vmem:[#allocation17 + $0x48] sm:$0xff]
      %v2302 = vld [vmem:[#allocation17 + $0x50] sm:$0xff]
      %v2303 = vld [vmem:[#allocation17 + $0x58] sm:$0xff]
      %v2304 = vld [vmem:[#allocation17 + $0x60] sm:$0xff]
      %v2305 = vld [vmem:[#allocation17 + $0x68] sm:$0xff]
      %v2306 = vld [vmem:[#allocation17 + $0x70] sm:$0xff]
      %v2307 = vld [vmem:[#allocation17 + $0x78] sm:$0xff]
      %s2308 = scalar_lea.vmem [#allocation4], 36
      %v2309 = vld [vmem:[%s2308] ss:$8 sm:$0x3]
      %v2311 = vlaneseq
      %v2312 = vshrl.u32 %v2311, 7
      %v2313 = vsub.s32 0, %v2312
      %v2314 = vrot.slane %v2309, %v2313
      %v2315 = vlaneseq
      %v2316 = vshrl.u32 %v2315, 7
      %v2317 = vsub.s32 1, %v2316
      %v2318 = vrot.slane %v2309, %v2317
      %v2337 = vunpack.c.l.b16 %v2292
      %v2338 = vunpack.c.h.b16 %v2292
      %v2339 = vunpack.c.l.b16 %v2293
      %v2340 = vunpack.c.h.b16 %v2293
      %v2341 = vunpack.c.l.b16 %v2294
      %v2342 = vunpack.c.h.b16 %v2294
      %v2343 = vunpack.c.l.b16 %v2295
      %v2344 = vunpack.c.h.b16 %v2295
      %v2345 = vunpack.c.l.b16 %v2296
      %v2346 = vunpack.c.h.b16 %v2296
      %v2347 = vunpack.c.l.b16 %v2297
      %v2348 = vunpack.c.h.b16 %v2297
      %v2349 = vunpack.c.l.b16 %v2298
      %v2350 = vunpack.c.h.b16 %v2298
      %v2351 = vunpack.c.l.b16 %v2299
      %v2352 = vunpack.c.h.b16 %v2299
      %v2353 = vunpack.c.l.b16 %v2300
      %v2354 = vunpack.c.h.b16 %v2300
      %v2355 = vunpack.c.l.b16 %v2301
      %v2356 = vunpack.c.h.b16 %v2301
      %v2357 = vunpack.c.l.b16 %v2302
      %v2358 = vunpack.c.h.b16 %v2302
      %v2359 = vunpack.c.l.b16 %v2303
      %v2360 = vunpack.c.h.b16 %v2303
      %v2361 = vunpack.c.l.b16 %v2304
      %v2362 = vunpack.c.h.b16 %v2304
      %v2363 = vunpack.c.l.b16 %v2305
      %v2364 = vunpack.c.h.b16 %v2305
      %v2365 = vunpack.c.l.b16 %v2306
      %v2366 = vunpack.c.h.b16 %v2306
      %v2367 = vunpack.c.l.b16 %v2307
      %v2368 = vunpack.c.h.b16 %v2307
      %v2369 = vpack.c.b16 %v2339, %v2337
      %v2370 = vpack.c.b16 %v2340, %v2338
      %v2371 = vpack.c.b16 %v2343, %v2341
      %v2372 = vpack.c.b16 %v2344, %v2342
      %v2373 = vpack.c.b16 %v2347, %v2345
      %v2374 = vpack.c.b16 %v2348, %v2346
      %v2375 = vpack.c.b16 %v2351, %v2349
      %v2376 = vpack.c.b16 %v2352, %v2350
      %v2377 = vpack.c.b16 %v2355, %v2353
      %v2378 = vpack.c.b16 %v2356, %v2354
      %v2379 = vpack.c.b16 %v2359, %v2357
      %v2380 = vpack.c.b16 %v2360, %v2358
      %v2381 = vpack.c.b16 %v2363, %v2361
      %v2382 = vpack.c.b16 %v2364, %v2362
      %v2383 = vpack.c.b16 %v2367, %v2365
      %v2384 = vpack.c.b16 %v2368, %v2366
      %2401 = vmatprep.subr.bf16.mxu0 %v2370
      %2402 = vmatpush1.bf16.msra.mxu0 %v2369
      %2403 = vmatprep.subr.bf16.mxu0 %v2372
      %2404 = vmatpush1.bf16.msra.mxu0 %v2371
      %2405 = vmatprep.subr.bf16.mxu0 %v2374
      %2406 = vmatpush1.bf16.msra.mxu0 %v2373
      %2407 = vmatprep.subr.bf16.mxu0 %v2376
      %2408 = vmatpush1.bf16.msra.mxu0 %v2375
      %2409 = vmatprep.subr.bf16.mxu0 %v2378
      %2410 = vmatpush1.bf16.msra.mxu0 %v2377
      %2411 = vmatprep.subr.bf16.mxu0 %v2380
      %2412 = vmatpush1.bf16.msra.mxu0 %v2379
      %2413 = vmatprep.subr.bf16.mxu0 %v2382
      %2414 = vmatpush1.bf16.msra.mxu0 %v2381
      %2415 = vmatprep.subr.bf16.mxu0 %v2384
      %2416 = vmatpush1.bf16.msra.mxu0 %v2383
      %2417 = vmatprep.subr.bf16.mxu0 0
      %2418 = vmatpush1.bf16.msra.mxu0 0
      %2419 = vmatprep.subr.bf16.mxu0 0
      %2420 = vmatpush1.bf16.msra.mxu0 0
      %2421 = vmatprep.subr.bf16.mxu0 0
      %2422 = vmatpush1.bf16.msra.mxu0 0
      %2423 = vmatprep.subr.bf16.mxu0 0
      %2424 = vmatpush1.bf16.msra.mxu0 0
      %2425 = vmatprep.subr.bf16.mxu0 0
      %2426 = vmatpush1.bf16.msra.mxu0 0
      %2427 = vmatprep.subr.bf16.mxu0 0
      %2428 = vmatpush1.bf16.msra.mxu0 0
      %2429 = vmatprep.subr.bf16.mxu0 0
      %2430 = vmatpush1.bf16.msra.mxu0 0
      %2431 = vmatprep.subr.bf16.mxu0 0
      %2432 = vmatpush1.bf16.msra.mxu0 0
      %2433 = vmatprep.mubr.bf16.mxu0 0
      %2434 = vmatmul.mubr.bf16.gmra.mrb[0].mxu0 %v2291
      %v2435 = vpop.f32.mrb[0].mxu0
      %v2436 = vadd.f32 %v2314, %v2435
      %v2437 = vpop.f32.mrb[0].mxu0
      %v2438 = vadd.f32 %v2318, %v2437
      %v2439 = vpop.f32.mrb[0].mxu0
      %v2440 = vadd.f32 %v2314, %v2439
      %v2441 = vpop.f32.mrb[0].mxu0
      %v2442 = vadd.f32 %v2318, %v2441
      %2443 = vdwg.mxu0
      %v2444 = vmax.f32 %v2436, 0.0
      %v2445 = vmax.f32 %v2438, 0.0
      %v2446 = vmax.f32 %v2440, 0.0
      %v2447 = vmax.f32 %v2442, 0.0
      %2448 = vst [vmem:[%s13] sm:$0xff] %v2444
      %2449 = vst [vmem:[%s13 + $0x8] sm:$0xff] %v2445
      %2450 = vst [vmem:[%s13 + $0x10] sm:$0xff] %v2446
      %2451 = vst [vmem:[%s13 + $0x18] sm:$0xff] %v2447
      %v2452 = vpack.c.bf16 %v2446, %v2444
      %v2453 = vpack.c.bf16 %v2447, %v2445
      %v2454 = vld [vmem:[#allocation18] sm:$0xf]
      %v2455 = vld [vmem:[#allocation18 + $0x4] sm:$0xf]
      %v2456 = vld [vmem:[#allocation18 + $0x8] sm:$0xf]
      %v2457 = vld [vmem:[#allocation18 + $0xc] sm:$0xf]
      %v2458 = vld [vmem:[#allocation18 + $0x10] sm:$0xf]
      %v2459 = vld [vmem:[#allocation18 + $0x14] sm:$0xf]
      %v2460 = vld [vmem:[#allocation18 + $0x18] sm:$0xf]
      %v2461 = vld [vmem:[#allocation18 + $0x1c] sm:$0xf]
      %v2462 = vld [vmem:[#allocation18 + $0x20] sm:$0xf]
      %v2463 = vld [vmem:[#allocation18 + $0x24] sm:$0xf]
      %v2464 = vld [vmem:[#allocation18 + $0x28] sm:$0xf]
      %v2465 = vld [vmem:[#allocation18 + $0x2c] sm:$0xf]
      %v2466 = vld [vmem:[#allocation18 + $0x30] sm:$0xf]
      %v2467 = vld [vmem:[#allocation18 + $0x34] sm:$0xf]
      %v2468 = vld [vmem:[#allocation18 + $0x38] sm:$0xf]
      %v2469 = vld [vmem:[#allocation18 + $0x3c] sm:$0xf]
      %v2470 = vld [vmem:[#allocation18 + $0x40] sm:$0xf]
      %v2471 = vld [vmem:[#allocation18 + $0x44] sm:$0xf]
      %v2472 = vld [vmem:[#allocation18 + $0x48] sm:$0xf]
      %v2473 = vld [vmem:[#allocation18 + $0x4c] sm:$0xf]
      %v2474 = vld [vmem:[#allocation18 + $0x50] sm:$0xf]
      %v2475 = vld [vmem:[#allocation18 + $0x54] sm:$0xf]
      %v2476 = vld [vmem:[#allocation18 + $0x58] sm:$0xf]
      %v2477 = vld [vmem:[#allocation18 + $0x5c] sm:$0xf]
      %v2478 = vld [vmem:[#allocation18 + $0x60] sm:$0xf]
      %v2479 = vld [vmem:[#allocation18 + $0x64] sm:$0xf]
      %v2480 = vld [vmem:[#allocation18 + $0x68] sm:$0xf]
      %v2481 = vld [vmem:[#allocation18 + $0x6c] sm:$0xf]
      %v2482 = vld [vmem:[#allocation18 + $0x70] sm:$0xf]
      %v2483 = vld [vmem:[#allocation18 + $0x74] sm:$0xf]
      %v2484 = vld [vmem:[#allocation18 + $0x78] sm:$0xf]
      %v2485 = vld [vmem:[#allocation18 + $0x7c] sm:$0xf]
      %v2486 = vld [vmem:[#allocation4 + $0x25] ss:$0 sm:$0xff]
      %v2519 = vunpack.c.l.b16 %v2454
      %v2520 = vunpack.c.l.b16 %v2455
      %v2521 = vunpack.c.l.b16 %v2456
      %v2522 = vunpack.c.l.b16 %v2457
      %v2523 = vunpack.c.l.b16 %v2458
      %v2524 = vunpack.c.l.b16 %v2459
      %v2525 = vunpack.c.l.b16 %v2460
      %v2526 = vunpack.c.l.b16 %v2461
      %v2527 = vunpack.c.l.b16 %v2462
      %v2528 = vunpack.c.l.b16 %v2463
      %v2529 = vunpack.c.l.b16 %v2464
      %v2530 = vunpack.c.l.b16 %v2465
      %v2531 = vunpack.c.l.b16 %v2466
      %v2532 = vunpack.c.l.b16 %v2467
      %v2533 = vunpack.c.l.b16 %v2468
      %v2534 = vunpack.c.l.b16 %v2469
      %v2535 = vunpack.c.l.b16 %v2470
      %v2536 = vunpack.c.l.b16 %v2471
      %v2537 = vunpack.c.l.b16 %v2472
      %v2538 = vunpack.c.l.b16 %v2473
      %v2539 = vunpack.c.l.b16 %v2474
      %v2540 = vunpack.c.l.b16 %v2475
      %v2541 = vunpack.c.l.b16 %v2476
      %v2542 = vunpack.c.l.b16 %v2477
      %v2543 = vunpack.c.l.b16 %v2478
      %v2544 = vunpack.c.l.b16 %v2479
      %v2545 = vunpack.c.l.b16 %v2480
      %v2546 = vunpack.c.l.b16 %v2481
      %v2547 = vunpack.c.l.b16 %v2482
      %v2548 = vunpack.c.l.b16 %v2483
      %v2549 = vunpack.c.l.b16 %v2484
      %v2550 = vunpack.c.l.b16 %v2485
      %v2551 = vpack.c.b16 %v2520, %v2519
      %v2552 = vpack.c.b16 %v2522, %v2521
      %v2553 = vpack.c.b16 %v2524, %v2523
      %v2554 = vpack.c.b16 %v2526, %v2525
      %v2555 = vpack.c.b16 %v2528, %v2527
      %v2556 = vpack.c.b16 %v2530, %v2529
      %v2557 = vpack.c.b16 %v2532, %v2531
      %v2558 = vpack.c.b16 %v2534, %v2533
      %v2559 = vpack.c.b16 %v2536, %v2535
      %v2560 = vpack.c.b16 %v2538, %v2537
      %v2561 = vpack.c.b16 %v2540, %v2539
      %v2562 = vpack.c.b16 %v2542, %v2541
      %v2563 = vpack.c.b16 %v2544, %v2543
      %v2564 = vpack.c.b16 %v2546, %v2545
      %v2565 = vpack.c.b16 %v2548, %v2547
      %v2566 = vpack.c.b16 %v2550, %v2549
      %2583 = vmatprep.subr.bf16.mxu0 0
      %2584 = vmatpush1.bf16.msra.mxu0 %v2551
      %2585 = vmatprep.subr.bf16.mxu0 0
      %2586 = vmatpush1.bf16.msra.mxu0 %v2552
      %2587 = vmatprep.subr.bf16.mxu0 0
      %2588 = vmatpush1.bf16.msra.mxu0 %v2553
      %2589 = vmatprep.subr.bf16.mxu0 0
      %2590 = vmatpush1.bf16.msra.mxu0 %v2554
      %2591 = vmatprep.subr.bf16.mxu0 0
      %2592 = vmatpush1.bf16.msra.mxu0 %v2555
      %2593 = vmatprep.subr.bf16.mxu0 0
      %2594 = vmatpush1.bf16.msra.mxu0 %v2556
      %2595 = vmatprep.subr.bf16.mxu0 0
      %2596 = vmatpush1.bf16.msra.mxu0 %v2557
      %2597 = vmatprep.subr.bf16.mxu0 0
      %2598 = vmatpush1.bf16.msra.mxu0 %v2558
      %2599 = vmatprep.subr.bf16.mxu0 0
      %2600 = vmatpush1.bf16.msra.mxu0 %v2559
      %2601 = vmatprep.subr.bf16.mxu0 0
      %2602 = vmatpush1.bf16.msra.mxu0 %v2560
      %2603 = vmatprep.subr.bf16.mxu0 0
      %2604 = vmatpush1.bf16.msra.mxu0 %v2561
      %2605 = vmatprep.subr.bf16.mxu0 0
      %2606 = vmatpush1.bf16.msra.mxu0 %v2562
      %2607 = vmatprep.subr.bf16.mxu0 0
      %2608 = vmatpush1.bf16.msra.mxu0 %v2563
      %2609 = vmatprep.subr.bf16.mxu0 0
      %2610 = vmatpush1.bf16.msra.mxu0 %v2564
      %2611 = vmatprep.subr.bf16.mxu0 0
      %2612 = vmatpush1.bf16.msra.mxu0 %v2565
      %2613 = vmatprep.subr.bf16.mxu0 0
      %2614 = vmatpush1.bf16.msra.mxu0 %v2566
      %2615 = vmatprep.mubr.bf16.mxu0 %v2453
      %2616 = vmatmul.mubr.bf16.gmra.mrb[0].mxu0 %v2452
      %v2617 = vpop.f32.mrb[0].mxu0
      %v2618 = vadd.f32 %v2486, %v2617
      %v2619 = vpop.f32.mrb[0].mxu0
      %v2620 = vpop.f32.mrb[0].mxu0
      %v2621 = vadd.f32 %v2486, %v2620
      %v2622 = vpop.f32.mrb[0].mxu0
      %2623 = vdwg.mxu0
      %v2624 = vlaneseq
      %v2625 = vand.u32 %v2624, 127
      %vm2626 = vcmp.ge.s32.totalorder %v2625, 14
      %vm2627 = vcmp.lt.s32.totalorder %v2625, 20
      %vm2628 = vmand %vm2626, %vm2627
      %v2629 = vsel %vm2628, %v2618, -1e+30
      %v2630 = vsel %vm2628, %v2621, -1e+30
      %2631 = vmax.xlane.f32.xlu0 %v2629
      %v2632 = vpop.xlane.xlu0 %2631
      %2633 = vmax.xlane.f32.xlu0 %v2630
      %v2634 = vpop.xlane.xlu0 %2633
      %v2635 = vsub.f32 %v2629, %v2632
      %v2636 = vsub.f32 %v2630, %v2634
      %v2637 = vmul.f32 %v2635, 1.442695
      %v2638 = vpow.pop %v2637
      %v2639 = vmul.f32 %v2636, 1.442695
      %v2640 = vpow.pop %v2639
      %2641 = vadd.xlane.f32.xlu0 %v2638
      %v2642 = vpop.xlane.xlu0 %2641
      %2643 = vadd.xlane.f32.xlu0 %v2640
      %v2644 = vpop.xlane.xlu0 %2643
      %v2645 = vrcp.pop %v2642
      %v2646 = vrcp.pop %v2644
      %v2647 = vmul.f32 %v2638, %v2645
      %v2648 = vmul.f32 %v2640, %v2646
      %v2649 = vadd.f32 %v2618, %v1376
      %v2650 = vadd.f32 %v2621, %v1379
      %v2651 = vsel %vm2628, %v2647, %v2649
      %v2652 = vsel %vm2628, %v2648, %v2650
      %2653 = vst [vmem:[%s14] sm:$0xff] %v2651
      %2654 = vst [vmem:[%s14 + $0x8] sm:$0xff] %v2652
    $region101: #{avfdti_forward.1} parent=1 // pred_fallthru
      _
    // Predicated region
    $region102: #{avfdti_forward.1} parent=1 // pred_check
      _
    $region103: #{avfdti_forward.1} parent=1 // pred_check_branch
      %2656 = sbr.rel (0) target = $region105
    $region104: #{avfdti_forward.1} parent=1 // pred_region
      _
    $region105: #{avfdti_forward.1} parent=1 // pred_fallthru
      _
    // Predicated region
    $region106: #{avfdti_forward.1} parent=1 // pred_check
      _
    $region107: #{avfdti_forward.1} parent=1 // pred_check_branch
      %2658 = sbr.rel (0) target = $region109
    $region108: #{avfdti_forward.1} parent=1 // pred_region
      _
    $region109: #{avfdti_forward.1} parent=1 // pred_fallthru
      _
    // Predicated region
    $region110: #{avfdti_forward.1} parent=1 // pred_check
      _
    $region111: #{avfdti_forward.1} parent=1 // pred_check_branch
      %2660 = sbr.rel (0) target = $region113
    $region112: #{avfdti_forward.1} parent=1 // pred_region
      _
    $region113: #{avfdti_forward.1} parent=1 // pred_fallthru
      _
    // Predicated region
    $region114: #{avfdti_forward.1} parent=1 // pred_check
      _
    $region115: #{avfdti_forward.1} parent=1 // pred_check_branch
      %2662 = sbr.rel (0) target = $region117
    $region116: #{avfdti_forward.1} parent=1 // pred_region
      _
    $region117: #{avfdti_forward.1} parent=1 // pred_fallthru
      _
    %2663 = vsyncpa [#allocation5], 1
    %2664 = vsyncpa [#allocation7], 1
    %2665 = vsyncpa [#allocation10], 1
    %2666 = vsyncpa [#allocation13], 1
    %2667 = vsyncpa [#allocation16], 1
    %2668 = vsyncpa [#allocation19], 1

</llo_original>
